<compile_context>
chip_gen: v7x
topology: tpu7x:2x2x1
jax: 0.10.0
libtpu: 0.0.40
codegen_flags: <defaults>
</compile_context>

<pallas_src>
import jax
import jax.numpy as jnp
from jax import lax
from jax.experimental import pallas as pl
from jax.experimental.pallas import tpu as pltpu

OBS_DIM = 4
H0 = 128
HIDDEN = 32
NUM_ACTIONS = 2


def _a2c_core_kernel(obs_ref, nd_ref, h0_ref, c0_ref,
                     w0_ref, b0_ref, w1_ref, b1_ref,
                     wih_ref, whh_ref, bg_ref,
                     wh_ref, bh_ref,
                     heads_ref, h_out_ref, c_out_ref,
                     gx_ref, hall_ref):
    T, B, _ = obs_ref.shape
    H = HIDDEN

    # ---- hoisted feature MLP + input-gate contribution over all T*B rows ----
    obs2d = obs_ref[...].reshape(T * B, OBS_DIM)
    x = jnp.tanh(jnp.dot(obs2d, w0_ref[...],
                         preferred_element_type=jnp.float32) + b0_ref[...])
    x = jnp.tanh(jnp.dot(x, w1_ref[...],
                         preferred_element_type=jnp.float32) + b1_ref[...])
    # gates_x = x @ W_ih + (b_ih + b_hh), for every timestep at once
    gx = jnp.dot(x, wih_ref[...],
                 preferred_element_type=jnp.float32) + bg_ref[...]
    gx_ref[...] = gx.reshape(T, B, 4 * H)

    whh = whh_ref[...]
    nd = nd_ref[...]                                   # (T, B, 1) f32

    # Lane mask selecting the 'g' band (tanh) of the fused gates vector.
    # Hoisted once: broadcast_in_dim is not CSE'd inside loops.
    lane = lax.broadcasted_iota(jnp.int32, (B, 4 * H), 1)
    g_band = (lane >= 2 * H) & (lane < 3 * H)

    h = h0_ref[...]
    c = c0_ref[...]

    # Fully unrolled static loop (T is a trace-time constant, small).  Only the
    # sequential (B,H)@(H,4H) recurrence + VPU/EUP gate math remains here.
    for t in range(T):
        ndt = nd[t]                                    # (B, 1)
        h = ndt * h
        c = ndt * c
        gates = gx_ref[t] + jnp.dot(h, whh, preferred_element_type=jnp.float32)
        # sigmoid(z) = 0.5*tanh(z/2)+0.5  -> single full-vreg tanh (EUP) pass
        pre = jnp.where(g_band, gates, 0.5 * gates)
        th = jnp.tanh(pre)
        act = jnp.where(g_band, th, 0.5 * th + 0.5)
        i_g = act[:, 0 * H:1 * H]
        f_g = act[:, 1 * H:2 * H]
        g_g = act[:, 2 * H:3 * H]
        o_g = act[:, 3 * H:4 * H]
        c = f_g * c + i_g * g_g
        h = o_g * jnp.tanh(c)
        hall_ref[t] = h

    h_out_ref[...] = h
    c_out_ref[...] = c

    # ---- fused policy/baseline heads: ONE (T*B, H) @ (H, 3) matmul ----
    h_all = hall_ref[...].reshape(T * B, H)
    heads = jnp.dot(h_all, wh_ref[...],
                    preferred_element_type=jnp.float32) + bh_ref[...]
    heads_ref[...] = heads.reshape(T, B, NUM_ACTIONS + 1)


def init_params(key):
    """Deterministic init mimicking torch defaults (uniform(+-1/sqrt(fan_in)))."""
    def linear(k, fan_in, fan_out):
        k1, k2 = jax.random.split(k)
        bound = 1.0 / (fan_in ** 0.5)
        w = jax.random.uniform(k1, (fan_in, fan_out), jnp.float32, -bound, bound)
        b = jax.random.uniform(k2, (1, fan_out), jnp.float32, -bound, bound)
        return w, b

    keys = jax.random.split(key, 8)
    p = {}
    p['w0'], p['b0'] = linear(keys[0], OBS_DIM, H0)
    p['w1'], p['b1'] = linear(keys[1], H0, HIDDEN)
    bound = 1.0 / (HIDDEN ** 0.5)
    p['wih'] = jax.random.uniform(keys[2], (HIDDEN, 4 * HIDDEN), jnp.float32, -bound, bound)
    p['whh'] = jax.random.uniform(keys[3], (HIDDEN, 4 * HIDDEN), jnp.float32, -bound, bound)
    p['bih'] = jax.random.uniform(keys[4], (1, 4 * HIDDEN), jnp.float32, -bound, bound)
    p['bhh'] = jax.random.uniform(keys[5], (1, 4 * HIDDEN), jnp.float32, -bound, bound)
    p['wp'], p['bp'] = linear(keys[6], HIDDEN, NUM_ACTIONS)
    p['wb'], p['bb'] = linear(keys[7], HIDDEN, 1)
    return p


@jax.jit
def a2c_forward(obs, done, core_state, params, sample_key):
    """obs: (T, B, 4) f32, done: (T, B) bool, core_state: ((B,32),(B,32))."""
    T, B, _ = obs.shape
    h0, c0 = core_state

    # not-done mask precomputed once as f32 (no per-step int->float cast)
    nd = 1.0 - done.astype(jnp.float32)[..., None]               # (T, B, 1)

    # Pad batch to a multiple of 8 (f32 sublane height) for full vreg use.
    B_pad = ((B + 7) // 8) * 8
    if B_pad != B:
        pad = B_pad - B
        obs_p = jnp.pad(obs, ((0, 0), (0, pad), (0, 0)))
        nd_p = jnp.pad(nd, ((0, 0), (0, pad), (0, 0)), constant_values=1.0)
        h0_p = jnp.pad(h0, ((0, pad), (0, 0)))
        c0_p = jnp.pad(c0, ((0, pad), (0, 0)))
    else:
        obs_p, nd_p, h0_p, c0_p = obs, nd, h0, c0

    # Fold biases / fuse the two head projections outside the kernel.
    b_gates = params['bih'] + params['bhh']                      # (1, 4H)
    w_heads = jnp.concatenate([params['wp'], params['wb']], axis=1)  # (H, 3)
    b_heads = jnp.concatenate([params['bp'], params['bb']], axis=1)  # (1, 3)

    inputs = (obs_p, nd_p, h0_p, c0_p,
              params['w0'], params['b0'], params['w1'], params['b1'],
              params['wih'], params['whh'], b_gates,
              w_heads, b_heads)

    vmem = lambda: pl.BlockSpec(memory_space=pltpu.MemorySpace.VMEM)
    out_shape = (
        jax.ShapeDtypeStruct((T, B_pad, NUM_ACTIONS + 1), jnp.float32),  # [logits|baseline]
        jax.ShapeDtypeStruct((B_pad, HIDDEN), jnp.float32),              # h_out
        jax.ShapeDtypeStruct((B_pad, HIDDEN), jnp.float32),              # c_out
    )
    # TODO(synk): for large B on v7x, add a "parallel" grid axis over batch
    # tiles (and tile T) so both TensorCores are used and VMEM stays bounded.
    heads, h_out, c_out = pl.pallas_call(
        _a2c_core_kernel,
        out_shape=out_shape,
        in_specs=[vmem() for _ in inputs],
        out_specs=tuple(vmem() for _ in out_shape),
        scratch_shapes=[pltpu.VMEM((T, B_pad, 4 * HIDDEN), jnp.float32),  # gates_x
                        pltpu.VMEM((T, B_pad, HIDDEN), jnp.float32)],     # h_all
    )(*inputs)

    heads = heads[:, :B, :]
    logits = heads[..., :NUM_ACTIONS]                            # (T, B, A)
    baseline = heads[..., NUM_ACTIONS]                           # (T, B)
    h_out = h_out[:B]
    c_out = c_out[:B]

    # torch.multinomial(F.softmax(logits), 1) == categorical sampling
    # (RNG streams differ from torch; distribution is identical).
    action = jax.random.categorical(sample_key, logits, axis=-1)  # (T, B)
    return (action, logits, baseline), (h_out, c_out)


def ref_forward(obs, done, h0, c0, p):
    """Pure-JAX reference of the torch forward (unroll=True path)."""
    T, B, _ = obs.shape
    x = obs.reshape(T * B, -1)
    x = jnp.tanh(x @ p['w0'] + p['b0'])
    x = jnp.tanh(x @ p['w1'] + p['b1'])
    x = x.reshape(T, B, -1)
    notdone = (1.0 - done.astype(jnp.float32))[..., None]
    h, c = h0, c0
    outs = []
    for t in range(T):
        h = notdone[t] * h
        c = notdone[t] * c
        gates = x[t] @ p['wih'] + p['bih'] + h @ p['whh'] + p['bhh']
        i_g, f_g, g_g, o_g = jnp.split(gates, 4, axis=-1)
        i_g = jax.nn.sigmoid(i_g)
        f_g = jax.nn.sigmoid(f_g)
        g_g = jnp.tanh(g_g)
        o_g = jax.nn.sigmoid(o_g)
        c = f_g * c + i_g * g_g
        h = o_g * jnp.tanh(c)
        outs.append(h)
    core = jnp.stack(outs)                                          # (T, B, H)
    logits = core @ p['wp'] + p['bp']
    baseline = (core @ p['wb'] + p['bb'])[..., 0]
    return logits, baseline, h, c


if __name__ == "__main__":
    key = jax.random.PRNGKey(0)
    pkey, okey, dkey, skey = jax.random.split(key, 4)

    T, B = 8, 2
    params = init_params(pkey)
    obs = jax.random.normal(okey, (T, B, OBS_DIM), jnp.float32)
    done = jax.random.bernoulli(dkey, 0.2, (T, B))
    h0 = jnp.zeros((B, HIDDEN), jnp.float32)
    c0 = jnp.zeros((B, HIDDEN), jnp.float32)

    (action, logits, baseline), (h_out, c_out) = a2c_forward(
        obs, done, (h0, c0), params, skey)
    jax.block_until_ready((action, logits, baseline, h_out, c_out))

    ref_logits, ref_base, ref_h, ref_c = ref_forward(obs, done, h0, c0, params)
    assert action.shape == (T, B)
    assert logits.shape == (T, B, NUM_ACTIONS)
    assert baseline.shape == (T, B)
    assert jnp.allclose(logits, ref_logits, atol=1e-4, rtol=1e-4)
    assert jnp.allclose(baseline, ref_base, atol=1e-4, rtol=1e-4)
    assert jnp.allclose(h_out, ref_h, atol=1e-4, rtol=1e-4)
    assert jnp.allclose(c_out, ref_c, atol=1e-4, rtol=1e-4)

    print("KERNEL_OK")
</pallas_src>

<mosaic_0001>
module attributes {stable_mosaic.version = 11 : i64} {
  func.func @_a2c_core_kernel(%arg0: memref<8x8x4xf32, #tpu.memory_space<vmem>>, %arg1: memref<8x8x1xf32, #tpu.memory_space<vmem>>, %arg2: memref<8x32xf32, #tpu.memory_space<vmem>>, %arg3: memref<8x32xf32, #tpu.memory_space<vmem>>, %arg4: memref<4x128xf32, #tpu.memory_space<vmem>>, %arg5: memref<1x128xf32, #tpu.memory_space<vmem>>, %arg6: memref<128x32xf32, #tpu.memory_space<vmem>>, %arg7: memref<1x32xf32, #tpu.memory_space<vmem>>, %arg8: memref<32x128xf32, #tpu.memory_space<vmem>>, %arg9: memref<32x128xf32, #tpu.memory_space<vmem>>, %arg10: memref<1x128xf32, #tpu.memory_space<vmem>>, %arg11: memref<32x3xf32, #tpu.memory_space<vmem>>, %arg12: memref<1x3xf32, #tpu.memory_space<vmem>>, %arg13: memref<8x8x3xf32, #tpu.memory_space<vmem>>, %arg14: memref<8x32xf32, #tpu.memory_space<vmem>>, %arg15: memref<8x32xf32, #tpu.memory_space<vmem>>, %arg16: memref<8x8x128xf32, #tpu.memory_space<vmem>>, %arg17: memref<8x8x32xf32, #tpu.memory_space<vmem>>) attributes {dimension_semantics = [], scalar_prefetch = 0 : i64, scratch_operands = 2 : i64, tpu.core_type = #tpu.core_type<tc>} {
    %c0 = arith.constant 0 : index
    %c0_0 = arith.constant 0 : index
    %c0_1 = arith.constant 0 : index
    %0 = vector.load %arg0[%c0, %c0_0, %c0_1] : memref<8x8x4xf32, #tpu.memory_space<vmem>>, vector<8x8x4xf32>
    %1 = vector.shape_cast %0 : vector<8x8x4xf32> to vector<64x4xf32>
    %c0_2 = arith.constant 0 : index
    %c0_3 = arith.constant 0 : index
    %2 = vector.load %arg4[%c0_2, %c0_3] : memref<4x128xf32, #tpu.memory_space<vmem>>, vector<4x128xf32>
    %cst = arith.constant dense<0.000000e+00> : vector<64x128xf32>
    %3 = tpu.matmul %1, %2, %cst {dimension_numbers = #tpu.dot_dimension_numbers<[1], [0], [0], [1], [0, 0, 1, 1], [], []>} : vector<64x4xf32>, vector<4x128xf32>, vector<64x128xf32> -> vector<64x128xf32>
    %c0_4 = arith.constant 0 : index
    %c0_5 = arith.constant 0 : index
    %4 = vector.load %arg5[%c0_4, %c0_5] : memref<1x128xf32, #tpu.memory_space<vmem>>, vector<1x128xf32>
    %5 = vector.broadcast %4 : vector<1x128xf32> to vector<64x128xf32>
    %6 = arith.addf %3, %5 : vector<64x128xf32>
    %7 = math.tanh %6 : vector<64x128xf32>
    %c0_6 = arith.constant 0 : index
    %c0_7 = arith.constant 0 : index
    %8 = vector.load %arg6[%c0_6, %c0_7] : memref<128x32xf32, #tpu.memory_space<vmem>>, vector<128x32xf32>
    %cst_8 = arith.constant dense<0.000000e+00> : vector<64x32xf32>
    %9 = tpu.matmul %7, %8, %cst_8 {dimension_numbers = #tpu.dot_dimension_numbers<[1], [0], [0], [1], [0, 0, 1, 1], [], []>} : vector<64x128xf32>, vector<128x32xf32>, vector<64x32xf32> -> vector<64x32xf32>
    %c0_9 = arith.constant 0 : index
    %c0_10 = arith.constant 0 : index
    %10 = vector.load %arg7[%c0_9, %c0_10] : memref<1x32xf32, #tpu.memory_space<vmem>>, vector<1x32xf32>
    %11 = vector.broadcast %10 : vector<1x32xf32> to vector<64x32xf32>
    %12 = arith.addf %9, %11 : vector<64x32xf32>
    %13 = math.tanh %12 : vector<64x32xf32>
    %c0_11 = arith.constant 0 : index
    %c0_12 = arith.constant 0 : index
    %14 = vector.load %arg8[%c0_11, %c0_12] : memref<32x128xf32, #tpu.memory_space<vmem>>, vector<32x128xf32>
    %cst_13 = arith.constant dense<0.000000e+00> : vector<64x128xf32>
    %15 = tpu.matmul %13, %14, %cst_13 {dimension_numbers = #tpu.dot_dimension_numbers<[1], [0], [0], [1], [0, 0, 1, 1], [], []>} : vector<64x32xf32>, vector<32x128xf32>, vector<64x128xf32> -> vector<64x128xf32>
    %c0_14 = arith.constant 0 : index
    %c0_15 = arith.constant 0 : index
    %16 = vector.load %arg10[%c0_14, %c0_15] : memref<1x128xf32, #tpu.memory_space<vmem>>, vector<1x128xf32>
    %17 = vector.broadcast %16 : vector<1x128xf32> to vector<64x128xf32>
    %18 = arith.addf %15, %17 : vector<64x128xf32>
    %19 = vector.shape_cast %18 : vector<64x128xf32> to vector<8x8x128xf32>
    %c0_16 = arith.constant 0 : index
    %c0_17 = arith.constant 0 : index
    %c0_18 = arith.constant 0 : index
    %20 = vector.load %arg16[%c0_16, %c0_17, %c0_18] : memref<8x8x128xf32, #tpu.memory_space<vmem>>, vector<8x8x128xf32>
    tpu.vector_store %arg16[%c0_16, %c0_17, %c0_18], %19 {strides = array<i32>} : memref<8x8x128xf32, #tpu.memory_space<vmem>>, vector<8x8x128xf32>,
    %c0_19 = arith.constant 0 : index
    %c0_20 = arith.constant 0 : index
    %21 = vector.load %arg9[%c0_19, %c0_20] : memref<32x128xf32, #tpu.memory_space<vmem>>, vector<32x128xf32>
    %c0_21 = arith.constant 0 : index
    %c0_22 = arith.constant 0 : index
    %c0_23 = arith.constant 0 : index
    %22 = vector.load %arg1[%c0_21, %c0_22, %c0_23] : memref<8x8x1xf32, #tpu.memory_space<vmem>>, vector<8x8x1xf32>
    %23 = tpu.iota {dimensions = array<i32: 1>} : vector<8x128xi32>
    %c64_i32 = arith.constant 64 : i32
    %24 = vector.broadcast %c64_i32 : i32 to vector<8x128xi32>
    %25 = arith.cmpi sge, %23, %24 : vector<8x128xi32>
    %c96_i32 = arith.constant 96 : i32
    %26 = vector.broadcast %c96_i32 : i32 to vector<8x128xi32>
    %27 = arith.cmpi slt, %23, %26 : vector<8x128xi32>
    %28 = arith.andi %25, %27 : vector<8x128xi1>
    %c0_24 = arith.constant 0 : index
    %c0_25 = arith.constant 0 : index
    %29 = vector.load %arg2[%c0_24, %c0_25] : memref<8x32xf32, #tpu.memory_space<vmem>>, vector<8x32xf32>
    %c0_26 = arith.constant 0 : index
    %c0_27 = arith.constant 0 : index
    %30 = vector.load %arg3[%c0_26, %c0_27] : memref<8x32xf32, #tpu.memory_space<vmem>>, vector<8x32xf32>
    %31 = vector.extract_strided_slice %22 {offsets = [0, 0, 0], sizes = [1, 8, 1], strides = [1, 1, 1]} : vector<8x8x1xf32> to vector<1x8x1xf32>
    %32 = vector.shape_cast %31 : vector<1x8x1xf32> to vector<8x1xf32>
    %33 = vector.broadcast %32 : vector<8x1xf32> to vector<8x32xf32>
    %34 = arith.mulf %33, %29 : vector<8x32xf32>
    %35 = vector.broadcast %32 : vector<8x1xf32> to vector<8x32xf32>
    %36 = arith.mulf %35, %30 : vector<8x32xf32>
    %c0_28 = arith.constant 0 : index
    %c0_29 = arith.constant 0 : index
    %c0_30 = arith.constant 0 : index
    %37 = vector.load %arg16[%c0_28, %c0_29, %c0_30] : memref<8x8x128xf32, #tpu.memory_space<vmem>>, vector<1x8x128xf32>
    %38 = vector.shape_cast %37 : vector<1x8x128xf32> to vector<8x128xf32>
    %cst_31 = arith.constant dense<0.000000e+00> : vector<8x128xf32>
    %39 = tpu.matmul %34, %21, %cst_31 {dimension_numbers = #tpu.dot_dimension_numbers<[1], [0], [0], [1], [0, 0, 1, 1], [], []>} : vector<8x32xf32>, vector<32x128xf32>, vector<8x128xf32> -> vector<8x128xf32>
    %40 = arith.addf %38, %39 : vector<8x128xf32>
    %cst_32 = arith.constant 5.000000e-01 : f32
    %41 = vector.broadcast %cst_32 : f32 to vector<8x128xf32>
    %42 = arith.mulf %41, %40 : vector<8x128xf32>
    %43 = arith.select %28, %40, %42 : vector<8x128xi1>, vector<8x128xf32>
    %44 = math.tanh %43 : vector<8x128xf32>
    %cst_33 = arith.constant 5.000000e-01 : f32
    %45 = vector.broadcast %cst_33 : f32 to vector<8x128xf32>
    %46 = arith.mulf %45, %44 : vector<8x128xf32>
    %cst_34 = arith.constant 5.000000e-01 : f32
    %47 = vector.broadcast %cst_34 : f32 to vector<8x128xf32>
    %48 = arith.addf %46, %47 : vector<8x128xf32>
    %49 = arith.select %28, %44, %48 : vector<8x128xi1>, vector<8x128xf32>
    %50 = vector.extract_strided_slice %49 {offsets = [0, 0], sizes = [8, 32], strides = [1, 1]} : vector<8x128xf32> to vector<8x32xf32>
    %51 = vector.extract_strided_slice %49 {offsets = [0, 32], sizes = [8, 32], strides = [1, 1]} : vector<8x128xf32> to vector<8x32xf32>
    %52 = vector.extract_strided_slice %49 {offsets = [0, 64], sizes = [8, 32], strides = [1, 1]} : vector<8x128xf32> to vector<8x32xf32>
    %53 = vector.extract_strided_slice %49 {offsets = [0, 96], sizes = [8, 32], strides = [1, 1]} : vector<8x128xf32> to vector<8x32xf32>
    %54 = arith.mulf %51, %36 : vector<8x32xf32>
    %55 = arith.mulf %50, %52 : vector<8x32xf32>
    %56 = arith.addf %54, %55 : vector<8x32xf32>
    %57 = math.tanh %56 : vector<8x32xf32>
    %58 = arith.mulf %53, %57 : vector<8x32xf32>
    %c0_35 = arith.constant 0 : index
    %c0_36 = arith.constant 0 : index
    %c0_37 = arith.constant 0 : index
    %59 = vector.load %arg17[%c0_35, %c0_36, %c0_37] : memref<8x8x32xf32, #tpu.memory_space<vmem>>, vector<1x8x32xf32>
    %60 = vector.shape_cast %59 : vector<1x8x32xf32> to vector<8x32xf32>
    %61 = vector.shape_cast %58 : vector<8x32xf32> to vector<1x8x32xf32>
    tpu.vector_store %arg17[%c0_35, %c0_36, %c0_37], %61 {strides = array<i32>} : memref<8x8x32xf32, #tpu.memory_space<vmem>>, vector<1x8x32xf32>,
    %62 = vector.extract_strided_slice %22 {offsets = [1, 0, 0], sizes = [1, 8, 1], strides = [1, 1, 1]} : vector<8x8x1xf32> to vector<1x8x1xf32>
    %63 = vector.shape_cast %62 : vector<1x8x1xf32> to vector<8x1xf32>
    %64 = vector.broadcast %63 : vector<8x1xf32> to vector<8x32xf32>
    %65 = arith.mulf %64, %58 : vector<8x32xf32>
    %66 = vector.broadcast %63 : vector<8x1xf32> to vector<8x32xf32>
    %67 = arith.mulf %66, %56 : vector<8x32xf32>
    %c1 = arith.constant 1 : index
    %c0_38 = arith.constant 0 : index
    %c0_39 = arith.constant 0 : index
    %68 = vector.load %arg16[%c1, %c0_38, %c0_39] : memref<8x8x128xf32, #tpu.memory_space<vmem>>, vector<1x8x128xf32>
    %69 = vector.shape_cast %68 : vector<1x8x128xf32> to vector<8x128xf32>
    %cst_40 = arith.constant dense<0.000000e+00> : vector<8x128xf32>
    %70 = tpu.matmul %65, %21, %cst_40 {dimension_numbers = #tpu.dot_dimension_numbers<[1], [0], [0], [1], [0, 0, 1, 1], [], []>} : vector<8x32xf32>, vector<32x128xf32>, vector<8x128xf32> -> vector<8x128xf32>
    %71 = arith.addf %69, %70 : vector<8x128xf32>
    %cst_41 = arith.constant 5.000000e-01 : f32
    %72 = vector.broadcast %cst_41 : f32 to vector<8x128xf32>
    %73 = arith.mulf %72, %71 : vector<8x128xf32>
    %74 = arith.select %28, %71, %73 : vector<8x128xi1>, vector<8x128xf32>
    %75 = math.tanh %74 : vector<8x128xf32>
    %cst_42 = arith.constant 5.000000e-01 : f32
    %76 = vector.broadcast %cst_42 : f32 to vector<8x128xf32>
    %77 = arith.mulf %76, %75 : vector<8x128xf32>
    %cst_43 = arith.constant 5.000000e-01 : f32
    %78 = vector.broadcast %cst_43 : f32 to vector<8x128xf32>
    %79 = arith.addf %77, %78 : vector<8x128xf32>
    %80 = arith.select %28, %75, %79 : vector<8x128xi1>, vector<8x128xf32>
    %81 = vector.extract_strided_slice %80 {offsets = [0, 0], sizes = [8, 32], strides = [1, 1]} : vector<8x128xf32> to vector<8x32xf32>
    %82 = vector.extract_strided_slice %80 {offsets = [0, 32], sizes = [8, 32], strides = [1, 1]} : vector<8x128xf32> to vector<8x32xf32>
    %83 = vector.extract_strided_slice %80 {offsets = [0, 64], sizes = [8, 32], strides = [1, 1]} : vector<8x128xf32> to vector<8x32xf32>
    %84 = vector.extract_strided_slice %80 {offsets = [0, 96], sizes = [8, 32], strides = [1, 1]} : vector<8x128xf32> to vector<8x32xf32>
    %85 = arith.mulf %82, %67 : vector<8x32xf32>
    %86 = arith.mulf %81, %83 : vector<8x32xf32>
    %87 = arith.addf %85, %86 : vector<8x32xf32>
    %88 = math.tanh %87 : vector<8x32xf32>
    %89 = arith.mulf %84, %88 : vector<8x32xf32>
    %c1_44 = arith.constant 1 : index
    %c0_45 = arith.constant 0 : index
    %c0_46 = arith.constant 0 : index
    %90 = vector.load %arg17[%c1_44, %c0_45, %c0_46] : memref<8x8x32xf32, #tpu.memory_space<vmem>>, vector<1x8x32xf32>
    %91 = vector.shape_cast %90 : vector<1x8x32xf32> to vector<8x32xf32>
    %92 = vector.shape_cast %89 : vector<8x32xf32> to vector<1x8x32xf32>
    tpu.vector_store %arg17[%c1_44, %c0_45, %c0_46], %92 {strides = array<i32>} : memref<8x8x32xf32, #tpu.memory_space<vmem>>, vector<1x8x32xf32>,
    %93 = vector.extract_strided_slice %22 {offsets = [2, 0, 0], sizes = [1, 8, 1], strides = [1, 1, 1]} : vector<8x8x1xf32> to vector<1x8x1xf32>
    %94 = vector.shape_cast %93 : vector<1x8x1xf32> to vector<8x1xf32>
    %95 = vector.broadcast %94 : vector<8x1xf32> to vector<8x32xf32>
    %96 = arith.mulf %95, %89 : vector<8x32xf32>
    %97 = vector.broadcast %94 : vector<8x1xf32> to vector<8x32xf32>
    %98 = arith.mulf %97, %87 : vector<8x32xf32>
    %c2 = arith.constant 2 : index
    %c0_47 = arith.constant 0 : index
    %c0_48 = arith.constant 0 : index
    %99 = vector.load %arg16[%c2, %c0_47, %c0_48] : memref<8x8x128xf32, #tpu.memory_space<vmem>>, vector<1x8x128xf32>
    %100 = vector.shape_cast %99 : vector<1x8x128xf32> to vector<8x128xf32>
    %cst_49 = arith.constant dense<0.000000e+00> : vector<8x128xf32>
    %101 = tpu.matmul %96, %21, %cst_49 {dimension_numbers = #tpu.dot_dimension_numbers<[1], [0], [0], [1], [0, 0, 1, 1], [], []>} : vector<8x32xf32>, vector<32x128xf32>, vector<8x128xf32> -> vector<8x128xf32>
    %102 = arith.addf %100, %101 : vector<8x128xf32>
    %cst_50 = arith.constant 5.000000e-01 : f32
    %103 = vector.broadcast %cst_50 : f32 to vector<8x128xf32>
    %104 = arith.mulf %103, %102 : vector<8x128xf32>
    %105 = arith.select %28, %102, %104 : vector<8x128xi1>, vector<8x128xf32>
    %106 = math.tanh %105 : vector<8x128xf32>
    %cst_51 = arith.constant 5.000000e-01 : f32
    %107 = vector.broadcast %cst_51 : f32 to vector<8x128xf32>
    %108 = arith.mulf %107, %106 : vector<8x128xf32>
    %cst_52 = arith.constant 5.000000e-01 : f32
    %109 = vector.broadcast %cst_52 : f32 to vector<8x128xf32>
    %110 = arith.addf %108, %109 : vector<8x128xf32>
    %111 = arith.select %28, %106, %110 : vector<8x128xi1>, vector<8x128xf32>
    %112 = vector.extract_strided_slice %111 {offsets = [0, 0], sizes = [8, 32], strides = [1, 1]} : vector<8x128xf32> to vector<8x32xf32>
    %113 = vector.extract_strided_slice %111 {offsets = [0, 32], sizes = [8, 32], strides = [1, 1]} : vector<8x128xf32> to vector<8x32xf32>
    %114 = vector.extract_strided_slice %111 {offsets = [0, 64], sizes = [8, 32], strides = [1, 1]} : vector<8x128xf32> to vector<8x32xf32>
    %115 = vector.extract_strided_slice %111 {offsets = [0, 96], sizes = [8, 32], strides = [1, 1]} : vector<8x128xf32> to vector<8x32xf32>
    %116 = arith.mulf %113, %98 : vector<8x32xf32>
    %117 = arith.mulf %112, %114 : vector<8x32xf32>
    %118 = arith.addf %116, %117 : vector<8x32xf32>
    %119 = math.tanh %118 : vector<8x32xf32>
    %120 = arith.mulf %115, %119 : vector<8x32xf32>
    %c2_53 = arith.constant 2 : index
    %c0_54 = arith.constant 0 : index
    %c0_55 = arith.constant 0 : index
    %121 = vector.load %arg17[%c2_53, %c0_54, %c0_55] : memref<8x8x32xf32, #tpu.memory_space<vmem>>, vector<1x8x32xf32>
    %122 = vector.shape_cast %121 : vector<1x8x32xf32> to vector<8x32xf32>
    %123 = vector.shape_cast %120 : vector<8x32xf32> to vector<1x8x32xf32>
    tpu.vector_store %arg17[%c2_53, %c0_54, %c0_55], %123 {strides = array<i32>} : memref<8x8x32xf32, #tpu.memory_space<vmem>>, vector<1x8x32xf32>,
    %124 = vector.extract_strided_slice %22 {offsets = [3, 0, 0], sizes = [1, 8, 1], strides = [1, 1, 1]} : vector<8x8x1xf32> to vector<1x8x1xf32>
    %125 = vector.shape_cast %124 : vector<1x8x1xf32> to vector<8x1xf32>
    %126 = vector.broadcast %125 : vector<8x1xf32> to vector<8x32xf32>
    %127 = arith.mulf %126, %120 : vector<8x32xf32>
    %128 = vector.broadcast %125 : vector<8x1xf32> to vector<8x32xf32>
    %129 = arith.mulf %128, %118 : vector<8x32xf32>
    %c3 = arith.constant 3 : index
    %c0_56 = arith.constant 0 : index
    %c0_57 = arith.constant 0 : index
    %130 = vector.load %arg16[%c3, %c0_56, %c0_57] : memref<8x8x128xf32, #tpu.memory_space<vmem>>, vector<1x8x128xf32>
    %131 = vector.shape_cast %130 : vector<1x8x128xf32> to vector<8x128xf32>
    %cst_58 = arith.constant dense<0.000000e+00> : vector<8x128xf32>
    %132 = tpu.matmul %127, %21, %cst_58 {dimension_numbers = #tpu.dot_dimension_numbers<[1], [0], [0], [1], [0, 0, 1, 1], [], []>} : vector<8x32xf32>, vector<32x128xf32>, vector<8x128xf32> -> vector<8x128xf32>
    %133 = arith.addf %131, %132 : vector<8x128xf32>
    %cst_59 = arith.constant 5.000000e-01 : f32
    %134 = vector.broadcast %cst_59 : f32 to vector<8x128xf32>
    %135 = arith.mulf %134, %133 : vector<8x128xf32>
    %136 = arith.select %28, %133, %135 : vector<8x128xi1>, vector<8x128xf32>
    %137 = math.tanh %136 : vector<8x128xf32>
    %cst_60 = arith.constant 5.000000e-01 : f32
    %138 = vector.broadcast %cst_60 : f32 to vector<8x128xf32>
    %139 = arith.mulf %138, %137 : vector<8x128xf32>
    %cst_61 = arith.constant 5.000000e-01 : f32
    %140 = vector.broadcast %cst_61 : f32 to vector<8x128xf32>
    %141 = arith.addf %139, %140 : vector<8x128xf32>
    %142 = arith.select %28, %137, %141 : vector<8x128xi1>, vector<8x128xf32>
    %143 = vector.extract_strided_slice %142 {offsets = [0, 0], sizes = [8, 32], strides = [1, 1]} : vector<8x128xf32> to vector<8x32xf32>
    %144 = vector.extract_strided_slice %142 {offsets = [0, 32], sizes = [8, 32], strides = [1, 1]} : vector<8x128xf32> to vector<8x32xf32>
    %145 = vector.extract_strided_slice %142 {offsets = [0, 64], sizes = [8, 32], strides = [1, 1]} : vector<8x128xf32> to vector<8x32xf32>
    %146 = vector.extract_strided_slice %142 {offsets = [0, 96], sizes = [8, 32], strides = [1, 1]} : vector<8x128xf32> to vector<8x32xf32>
    %147 = arith.mulf %144, %129 : vector<8x32xf32>
    %148 = arith.mulf %143, %145 : vector<8x32xf32>
    %149 = arith.addf %147, %148 : vector<8x32xf32>
    %150 = math.tanh %149 : vector<8x32xf32>
    %151 = arith.mulf %146, %150 : vector<8x32xf32>
    %c3_62 = arith.constant 3 : index
    %c0_63 = arith.constant 0 : index
    %c0_64 = arith.constant 0 : index
    %152 = vector.load %arg17[%c3_62, %c0_63, %c0_64] : memref<8x8x32xf32, #tpu.memory_space<vmem>>, vector<1x8x32xf32>
    %153 = vector.shape_cast %152 : vector<1x8x32xf32> to vector<8x32xf32>
    %154 = vector.shape_cast %151 : vector<8x32xf32> to vector<1x8x32xf32>
    tpu.vector_store %arg17[%c3_62, %c0_63, %c0_64], %154 {strides = array<i32>} : memref<8x8x32xf32, #tpu.memory_space<vmem>>, vector<1x8x32xf32>,
    %155 = vector.extract_strided_slice %22 {offsets = [4, 0, 0], sizes = [1, 8, 1], strides = [1, 1, 1]} : vector<8x8x1xf32> to vector<1x8x1xf32>
    %156 = vector.shape_cast %155 : vector<1x8x1xf32> to vector<8x1xf32>
    %157 = vector.broadcast %156 : vector<8x1xf32> to vector<8x32xf32>
    %158 = arith.mulf %157, %151 : vector<8x32xf32>
    %159 = vector.broadcast %156 : vector<8x1xf32> to vector<8x32xf32>
    %160 = arith.mulf %159, %149 : vector<8x32xf32>
    %c4 = arith.constant 4 : index
    %c0_65 = arith.constant 0 : index
    %c0_66 = arith.constant 0 : index
    %161 = vector.load %arg16[%c4, %c0_65, %c0_66] : memref<8x8x128xf32, #tpu.memory_space<vmem>>, vector<1x8x128xf32>
    %162 = vector.shape_cast %161 : vector<1x8x128xf32> to vector<8x128xf32>
    %cst_67 = arith.constant dense<0.000000e+00> : vector<8x128xf32>
    %163 = tpu.matmul %158, %21, %cst_67 {dimension_numbers = #tpu.dot_dimension_numbers<[1], [0], [0], [1], [0, 0, 1, 1], [], []>} : vector<8x32xf32>, vector<32x128xf32>, vector<8x128xf32> -> vector<8x128xf32>
    %164 = arith.addf %162, %163 : vector<8x128xf32>
    %cst_68 = arith.constant 5.000000e-01 : f32
    %165 = vector.broadcast %cst_68 : f32 to vector<8x128xf32>
    %166 = arith.mulf %165, %164 : vector<8x128xf32>
    %167 = arith.select %28, %164, %166 : vector<8x128xi1>, vector<8x128xf32>
    %168 = math.tanh %167 : vector<8x128xf32>
    %cst_69 = arith.constant 5.000000e-01 : f32
    %169 = vector.broadcast %cst_69 : f32 to vector<8x128xf32>
    %170 = arith.mulf %169, %168 : vector<8x128xf32>
    %cst_70 = arith.constant 5.000000e-01 : f32
    %171 = vector.broadcast %cst_70 : f32 to vector<8x128xf32>
    %172 = arith.addf %170, %171 : vector<8x128xf32>
    %173 = arith.select %28, %168, %172 : vector<8x128xi1>, vector<8x128xf32>
    %174 = vector.extract_strided_slice %173 {offsets = [0, 0], sizes = [8, 32], strides = [1, 1]} : vector<8x128xf32> to vector<8x32xf32>
    %175 = vector.extract_strided_slice %173 {offsets = [0, 32], sizes = [8, 32], strides = [1, 1]} : vector<8x128xf32> to vector<8x32xf32>
    %176 = vector.extract_strided_slice %173 {offsets = [0, 64], sizes = [8, 32], strides = [1, 1]} : vector<8x128xf32> to vector<8x32xf32>
    %177 = vector.extract_strided_slice %173 {offsets = [0, 96], sizes = [8, 32], strides = [1, 1]} : vector<8x128xf32> to vector<8x32xf32>
    %178 = arith.mulf %175, %160 : vector<8x32xf32>
    %179 = arith.mulf %174, %176 : vector<8x32xf32>
    %180 = arith.addf %178, %179 : vector<8x32xf32>
    %181 = math.tanh %180 : vector<8x32xf32>
    %182 = arith.mulf %177, %181 : vector<8x32xf32>
    %c4_71 = arith.constant 4 : index
    %c0_72 = arith.constant 0 : index
    %c0_73 = arith.constant 0 : index
    %183 = vector.load %arg17[%c4_71, %c0_72, %c0_73] : memref<8x8x32xf32, #tpu.memory_space<vmem>>, vector<1x8x32xf32>
    %184 = vector.shape_cast %183 : vector<1x8x32xf32> to vector<8x32xf32>
    %185 = vector.shape_cast %182 : vector<8x32xf32> to vector<1x8x32xf32>
    tpu.vector_store %arg17[%c4_71, %c0_72, %c0_73], %185 {strides = array<i32>} : memref<8x8x32xf32, #tpu.memory_space<vmem>>, vector<1x8x32xf32>,
    %186 = vector.extract_strided_slice %22 {offsets = [5, 0, 0], sizes = [1, 8, 1], strides = [1, 1, 1]} : vector<8x8x1xf32> to vector<1x8x1xf32>
    %187 = vector.shape_cast %186 : vector<1x8x1xf32> to vector<8x1xf32>
    %188 = vector.broadcast %187 : vector<8x1xf32> to vector<8x32xf32>
    %189 = arith.mulf %188, %182 : vector<8x32xf32>
    %190 = vector.broadcast %187 : vector<8x1xf32> to vector<8x32xf32>
    %191 = arith.mulf %190, %180 : vector<8x32xf32>
    %c5 = arith.constant 5 : index
    %c0_74 = arith.constant 0 : index
    %c0_75 = arith.constant 0 : index
    %192 = vector.load %arg16[%c5, %c0_74, %c0_75] : memref<8x8x128xf32, #tpu.memory_space<vmem>>, vector<1x8x128xf32>
    %193 = vector.shape_cast %192 : vector<1x8x128xf32> to vector<8x128xf32>
    %cst_76 = arith.constant dense<0.000000e+00> : vector<8x128xf32>
    %194 = tpu.matmul %189, %21, %cst_76 {dimension_numbers = #tpu.dot_dimension_numbers<[1], [0], [0], [1], [0, 0, 1, 1], [], []>} : vector<8x32xf32>, vector<32x128xf32>, vector<8x128xf32> -> vector<8x128xf32>
    %195 = arith.addf %193, %194 : vector<8x128xf32>
    %cst_77 = arith.constant 5.000000e-01 : f32
    %196 = vector.broadcast %cst_77 : f32 to vector<8x128xf32>
    %197 = arith.mulf %196, %195 : vector<8x128xf32>
    %198 = arith.select %28, %195, %197 : vector<8x128xi1>, vector<8x128xf32>
    %199 = math.tanh %198 : vector<8x128xf32>
    %cst_78 = arith.constant 5.000000e-01 : f32
    %200 = vector.broadcast %cst_78 : f32 to vector<8x128xf32>
    %201 = arith.mulf %200, %199 : vector<8x128xf32>
    %cst_79 = arith.constant 5.000000e-01 : f32
    %202 = vector.broadcast %cst_79 : f32 to vector<8x128xf32>
    %203 = arith.addf %201, %202 : vector<8x128xf32>
    %204 = arith.select %28, %199, %203 : vector<8x128xi1>, vector<8x128xf32>
    %205 = vector.extract_strided_slice %204 {offsets = [0, 0], sizes = [8, 32], strides = [1, 1]} : vector<8x128xf32> to vector<8x32xf32>
    %206 = vector.extract_strided_slice %204 {offsets = [0, 32], sizes = [8, 32], strides = [1, 1]} : vector<8x128xf32> to vector<8x32xf32>
    %207 = vector.extract_strided_slice %204 {offsets = [0, 64], sizes = [8, 32], strides = [1, 1]} : vector<8x128xf32> to vector<8x32xf32>
    %208 = vector.extract_strided_slice %204 {offsets = [0, 96], sizes = [8, 32], strides = [1, 1]} : vector<8x128xf32> to vector<8x32xf32>
    %209 = arith.mulf %206, %191 : vector<8x32xf32>
    %210 = arith.mulf %205, %207 : vector<8x32xf32>
    %211 = arith.addf %209, %210 : vector<8x32xf32>
    %212 = math.tanh %211 : vector<8x32xf32>
    %213 = arith.mulf %208, %212 : vector<8x32xf32>
    %c5_80 = arith.constant 5 : index
    %c0_81 = arith.constant 0 : index
    %c0_82 = arith.constant 0 : index
    %214 = vector.load %arg17[%c5_80, %c0_81, %c0_82] : memref<8x8x32xf32, #tpu.memory_space<vmem>>, vector<1x8x32xf32>
    %215 = vector.shape_cast %214 : vector<1x8x32xf32> to vector<8x32xf32>
    %216 = vector.shape_cast %213 : vector<8x32xf32> to vector<1x8x32xf32>
    tpu.vector_store %arg17[%c5_80, %c0_81, %c0_82], %216 {strides = array<i32>} : memref<8x8x32xf32, #tpu.memory_space<vmem>>, vector<1x8x32xf32>,
    %217 = vector.extract_strided_slice %22 {offsets = [6, 0, 0], sizes = [1, 8, 1], strides = [1, 1, 1]} : vector<8x8x1xf32> to vector<1x8x1xf32>
    %218 = vector.shape_cast %217 : vector<1x8x1xf32> to vector<8x1xf32>
    %219 = vector.broadcast %218 : vector<8x1xf32> to vector<8x32xf32>
    %220 = arith.mulf %219, %213 : vector<8x32xf32>
    %221 = vector.broadcast %218 : vector<8x1xf32> to vector<8x32xf32>
    %222 = arith.mulf %221, %211 : vector<8x32xf32>
    %c6 = arith.constant 6 : index
    %c0_83 = arith.constant 0 : index
    %c0_84 = arith.constant 0 : index
    %223 = vector.load %arg16[%c6, %c0_83, %c0_84] : memref<8x8x128xf32, #tpu.memory_space<vmem>>, vector<1x8x128xf32>
    %224 = vector.shape_cast %223 : vector<1x8x128xf32> to vector<8x128xf32>
    %cst_85 = arith.constant dense<0.000000e+00> : vector<8x128xf32>
    %225 = tpu.matmul %220, %21, %cst_85 {dimension_numbers = #tpu.dot_dimension_numbers<[1], [0], [0], [1], [0, 0, 1, 1], [], []>} : vector<8x32xf32>, vector<32x128xf32>, vector<8x128xf32> -> vector<8x128xf32>
    %226 = arith.addf %224, %225 : vector<8x128xf32>
    %cst_86 = arith.constant 5.000000e-01 : f32
    %227 = vector.broadcast %cst_86 : f32 to vector<8x128xf32>
    %228 = arith.mulf %227, %226 : vector<8x128xf32>
    %229 = arith.select %28, %226, %228 : vector<8x128xi1>, vector<8x128xf32>
    %230 = math.tanh %229 : vector<8x128xf32>
    %cst_87 = arith.constant 5.000000e-01 : f32
    %231 = vector.broadcast %cst_87 : f32 to vector<8x128xf32>
    %232 = arith.mulf %231, %230 : vector<8x128xf32>
    %cst_88 = arith.constant 5.000000e-01 : f32
    %233 = vector.broadcast %cst_88 : f32 to vector<8x128xf32>
    %234 = arith.addf %232, %233 : vector<8x128xf32>
    %235 = arith.select %28, %230, %234 : vector<8x128xi1>, vector<8x128xf32>
    %236 = vector.extract_strided_slice %235 {offsets = [0, 0], sizes = [8, 32], strides = [1, 1]} : vector<8x128xf32> to vector<8x32xf32>
    %237 = vector.extract_strided_slice %235 {offsets = [0, 32], sizes = [8, 32], strides = [1, 1]} : vector<8x128xf32> to vector<8x32xf32>
    %238 = vector.extract_strided_slice %235 {offsets = [0, 64], sizes = [8, 32], strides = [1, 1]} : vector<8x128xf32> to vector<8x32xf32>
    %239 = vector.extract_strided_slice %235 {offsets = [0, 96], sizes = [8, 32], strides = [1, 1]} : vector<8x128xf32> to vector<8x32xf32>
    %240 = arith.mulf %237, %222 : vector<8x32xf32>
    %241 = arith.mulf %236, %238 : vector<8x32xf32>
    %242 = arith.addf %240, %241 : vector<8x32xf32>
    %243 = math.tanh %242 : vector<8x32xf32>
    %244 = arith.mulf %239, %243 : vector<8x32xf32>
    %c6_89 = arith.constant 6 : index
    %c0_90 = arith.constant 0 : index
    %c0_91 = arith.constant 0 : index
    %245 = vector.load %arg17[%c6_89, %c0_90, %c0_91] : memref<8x8x32xf32, #tpu.memory_space<vmem>>, vector<1x8x32xf32>
    %246 = vector.shape_cast %245 : vector<1x8x32xf32> to vector<8x32xf32>
    %247 = vector.shape_cast %244 : vector<8x32xf32> to vector<1x8x32xf32>
    tpu.vector_store %arg17[%c6_89, %c0_90, %c0_91], %247 {strides = array<i32>} : memref<8x8x32xf32, #tpu.memory_space<vmem>>, vector<1x8x32xf32>,
    %248 = vector.extract_strided_slice %22 {offsets = [7, 0, 0], sizes = [1, 8, 1], strides = [1, 1, 1]} : vector<8x8x1xf32> to vector<1x8x1xf32>
    %249 = vector.shape_cast %248 : vector<1x8x1xf32> to vector<8x1xf32>
    %250 = vector.broadcast %249 : vector<8x1xf32> to vector<8x32xf32>
    %251 = arith.mulf %250, %244 : vector<8x32xf32>
    %252 = vector.broadcast %249 : vector<8x1xf32> to vector<8x32xf32>
    %253 = arith.mulf %252, %242 : vector<8x32xf32>
    %c7 = arith.constant 7 : index
    %c0_92 = arith.constant 0 : index
    %c0_93 = arith.constant 0 : index
    %254 = vector.load %arg16[%c7, %c0_92, %c0_93] : memref<8x8x128xf32, #tpu.memory_space<vmem>>, vector<1x8x128xf32>
    %255 = vector.shape_cast %254 : vector<1x8x128xf32> to vector<8x128xf32>
    %cst_94 = arith.constant dense<0.000000e+00> : vector<8x128xf32>
    %256 = tpu.matmul %251, %21, %cst_94 {dimension_numbers = #tpu.dot_dimension_numbers<[1], [0], [0], [1], [0, 0, 1, 1], [], []>} : vector<8x32xf32>, vector<32x128xf32>, vector<8x128xf32> -> vector<8x128xf32>
    %257 = arith.addf %255, %256 : vector<8x128xf32>
    %cst_95 = arith.constant 5.000000e-01 : f32
    %258 = vector.broadcast %cst_95 : f32 to vector<8x128xf32>
    %259 = arith.mulf %258, %257 : vector<8x128xf32>
    %260 = arith.select %28, %257, %259 : vector<8x128xi1>, vector<8x128xf32>
    %261 = math.tanh %260 : vector<8x128xf32>
    %cst_96 = arith.constant 5.000000e-01 : f32
    %262 = vector.broadcast %cst_96 : f32 to vector<8x128xf32>
    %263 = arith.mulf %262, %261 : vector<8x128xf32>
    %cst_97 = arith.constant 5.000000e-01 : f32
    %264 = vector.broadcast %cst_97 : f32 to vector<8x128xf32>
    %265 = arith.addf %263, %264 : vector<8x128xf32>
    %266 = arith.select %28, %261, %265 : vector<8x128xi1>, vector<8x128xf32>
    %267 = vector.extract_strided_slice %266 {offsets = [0, 0], sizes = [8, 32], strides = [1, 1]} : vector<8x128xf32> to vector<8x32xf32>
    %268 = vector.extract_strided_slice %266 {offsets = [0, 32], sizes = [8, 32], strides = [1, 1]} : vector<8x128xf32> to vector<8x32xf32>
    %269 = vector.extract_strided_slice %266 {offsets = [0, 64], sizes = [8, 32], strides = [1, 1]} : vector<8x128xf32> to vector<8x32xf32>
    %270 = vector.extract_strided_slice %266 {offsets = [0, 96], sizes = [8, 32], strides = [1, 1]} : vector<8x128xf32> to vector<8x32xf32>
    %271 = arith.mulf %268, %253 : vector<8x32xf32>
    %272 = arith.mulf %267, %269 : vector<8x32xf32>
    %273 = arith.addf %271, %272 : vector<8x32xf32>
    %274 = math.tanh %273 : vector<8x32xf32>
    %275 = arith.mulf %270, %274 : vector<8x32xf32>
    %c7_98 = arith.constant 7 : index
    %c0_99 = arith.constant 0 : index
    %c0_100 = arith.constant 0 : index
    %276 = vector.load %arg17[%c7_98, %c0_99, %c0_100] : memref<8x8x32xf32, #tpu.memory_space<vmem>>, vector<1x8x32xf32>
    %277 = vector.shape_cast %276 : vector<1x8x32xf32> to vector<8x32xf32>
    %278 = vector.shape_cast %275 : vector<8x32xf32> to vector<1x8x32xf32>
    tpu.vector_store %arg17[%c7_98, %c0_99, %c0_100], %278 {strides = array<i32>} : memref<8x8x32xf32, #tpu.memory_space<vmem>>, vector<1x8x32xf32>,
    %c0_101 = arith.constant 0 : index
    %c0_102 = arith.constant 0 : index
    %279 = vector.load %arg14[%c0_101, %c0_102] : memref<8x32xf32, #tpu.memory_space<vmem>>, vector<8x32xf32>
    tpu.vector_store %arg14[%c0_101, %c0_102], %275 {strides = array<i32>} : memref<8x32xf32, #tpu.memory_space<vmem>>, vector<8x32xf32>,
    %c0_103 = arith.constant 0 : index
    %c0_104 = arith.constant 0 : index
    %280 = vector.load %arg15[%c0_103, %c0_104] : memref<8x32xf32, #tpu.memory_space<vmem>>, vector<8x32xf32>
    tpu.vector_store %arg15[%c0_103, %c0_104], %273 {strides = array<i32>} : memref<8x32xf32, #tpu.memory_space<vmem>>, vector<8x32xf32>,
    %c0_105 = arith.constant 0 : index
    %c0_106 = arith.constant 0 : index
    %c0_107 = arith.constant 0 : index
    %281 = vector.load %arg17[%c0_105, %c0_106, %c0_107] : memref<8x8x32xf32, #tpu.memory_space<vmem>>, vector<8x8x32xf32>
    %282 = vector.shape_cast %281 : vector<8x8x32xf32> to vector<64x32xf32>
    %c0_108 = arith.constant 0 : index
    %c0_109 = arith.constant 0 : index
    %283 = vector.load %arg11[%c0_108, %c0_109] : memref<32x3xf32, #tpu.memory_space<vmem>>, vector<32x3xf32>
    %cst_110 = arith.constant dense<0.000000e+00> : vector<64x3xf32>
    %284 = tpu.matmul %282, %283, %cst_110 {dimension_numbers = #tpu.dot_dimension_numbers<[1], [0], [0], [1], [0, 0, 1, 1], [], []>} : vector<64x32xf32>, vector<32x3xf32>, vector<64x3xf32> -> vector<64x3xf32>
    %c0_111 = arith.constant 0 : index
    %c0_112 = arith.constant 0 : index
    %285 = vector.load %arg12[%c0_111, %c0_112] : memref<1x3xf32, #tpu.memory_space<vmem>>, vector<1x3xf32>
    %286 = vector.broadcast %285 : vector<1x3xf32> to vector<64x3xf32>
    %287 = arith.addf %284, %286 : vector<64x3xf32>
    %288 = vector.shape_cast %287 : vector<64x3xf32> to vector<8x8x3xf32>
    %c0_113 = arith.constant 0 : index
    %c0_114 = arith.constant 0 : index
    %c0_115 = arith.constant 0 : index
    %289 = vector.load %arg13[%c0_113, %c0_114, %c0_115] : memref<8x8x3xf32, #tpu.memory_space<vmem>>, vector<8x8x3xf32>
    tpu.vector_store %arg13[%c0_113, %c0_114, %c0_115], %288 {strides = array<i32>} : memref<8x8x3xf32, #tpu.memory_space<vmem>>, vector<8x8x3xf32>,
    return
  }
}

</mosaic_0001>

<llo_original>
// kernel: a2c_forward.1
$region0: #{a2c_forward.1}
  #allocation0 [shape = 'u32[]', space=smem, size = 0x4, offset = 0x4, fixed_abs, tag = 'smem constant byte address 0x4 - core index']
  #allocation1 [shape = 'u32[144,128]{1,0:T(1,128)}', space=vmem, size = 0x12000, scoped, tag = 'internal scratch']
  #allocation2 [shape = 'f32[8,8,128]{2,1,0:T(8,128)}', space=vmem, size = 0x8000, scoped, tag = 'scratch operand']
  #allocation3 [shape = 'f32[8,8,32]{2,1,0:T(8,128)}', space=vmem, size = 0x8000, scoped, tag = 'scratch operand']
  %s0 = inlined_call_operand.vmem [shape: f32[8,8,4], index: 0, kind: input, shape index: {}]
  %s1 = inlined_call_operand.vmem [shape: f32[8,8,1], index: 1, kind: input, shape index: {}]
  %s2 = inlined_call_operand.vmem [shape: f32[8,32], index: 2, kind: input, shape index: {}]
  %s3 = inlined_call_operand.vmem [shape: f32[8,32], index: 3, kind: input, shape index: {}]
  %s4 = inlined_call_operand.vmem [shape: f32[4,128], index: 4, kind: input, shape index: {}]
  %s5 = inlined_call_operand.vmem [shape: f32[1,128], index: 5, kind: input, shape index: {}]
  %s6 = inlined_call_operand.vmem [shape: f32[128,32], index: 6, kind: input, shape index: {}]
  %s7 = inlined_call_operand.vmem [shape: f32[1,32], index: 7, kind: input, shape index: {}]
  %s8 = inlined_call_operand.vmem [shape: f32[32,128], index: 8, kind: input, shape index: {}]
  %s9 = inlined_call_operand.vmem [shape: f32[32,128], index: 9, kind: input, shape index: {}]
  %s10 = inlined_call_operand.vmem [shape: f32[1,128], index: 10, kind: input, shape index: {}]
  %s11 = inlined_call_operand.vmem [shape: f32[32,3], index: 11, kind: input, shape index: {}]
  %s12 = inlined_call_operand.vmem [shape: f32[1,3], index: 12, kind: input, shape index: {}]
  %s13 = inlined_call_operand.vmem [shape: f32[8,8,3], index: 13, kind: output, shape index: {0}]
  %s14 = inlined_call_operand.vmem [shape: f32[8,32], index: 14, kind: output, shape index: {1}]
  %s15 = inlined_call_operand.vmem [shape: f32[8,32], index: 15, kind: output, shape index: {2}]
  %16 = xla_tuple %s13, %s14, %s15
  %s17 = sld [smem:[#allocation0]]
  $region78: #{a2c_forward.1} parent=0
    _
  %s19 = ssub.s32 1, %s17
  %s20 = scalar_select 0, %s19, %s17
  // Predicated region
  $region2: #{a2c_forward.1} parent=0 // pred_check
    _
  $region3: #{a2c_forward.1} parent=0 // pred_check_branch
    %22 = sbr.rel (0) target = $region5
  $region4: #{a2c_forward.1} parent=0 // pred_region
    _
  $region5: #{a2c_forward.1} parent=0 // pred_fallthru
    _
  // Predicated region
  $region6: #{a2c_forward.1} parent=0 // pred_check
    _
  $region7: #{a2c_forward.1} parent=0 // pred_check_branch
    %24 = sbr.rel (0) target = $region9
  $region8: #{a2c_forward.1} parent=0 // pred_region
    _
  $region9: #{a2c_forward.1} parent=0 // pred_fallthru
    _
  // Predicated region
  $region10: #{a2c_forward.1} parent=0 // pred_check
    _
  $region11: #{a2c_forward.1} parent=0 // pred_check_branch
    %26 = sbr.rel (0) target = $region13
  $region12: #{a2c_forward.1} parent=0 // pred_region
    _
  $region13: #{a2c_forward.1} parent=0 // pred_fallthru
    _
  // Predicated region
  $region14: #{a2c_forward.1} parent=0 // pred_check
    _
  $region15: #{a2c_forward.1} parent=0 // pred_check_branch
    %28 = sbr.rel (0) target = $region17
  $region16: #{a2c_forward.1} parent=0 // pred_region
    _
  $region17: #{a2c_forward.1} parent=0 // pred_fallthru
    _
  // Predicated region
  $region18: #{a2c_forward.1} parent=0 // pred_check
    _
  $region19: #{a2c_forward.1} parent=0 // pred_check_branch
    %30 = sbr.rel (0) target = $region21
  $region20: #{a2c_forward.1} parent=0 // pred_region
    _
  $region21: #{a2c_forward.1} parent=0 // pred_fallthru
    _
  // Predicated region
  $region22: #{a2c_forward.1} parent=0 // pred_check
    _
  $region23: #{a2c_forward.1} parent=0 // pred_check_branch
    %32 = sbr.rel (0) target = $region25
  $region24: #{a2c_forward.1} parent=0 // pred_region
    _
  $region25: #{a2c_forward.1} parent=0 // pred_fallthru
    _
  // Predicated region
  $region26: #{a2c_forward.1} parent=0 // pred_check
    _
  $region27: #{a2c_forward.1} parent=0 // pred_check_branch
    %34 = sbr.rel (0) target = $region29
  $region28: #{a2c_forward.1} parent=0 // pred_region
    _
  $region29: #{a2c_forward.1} parent=0 // pred_fallthru
    _
  // Predicated region
  $region30: #{a2c_forward.1} parent=0 // pred_check
    _
  $region31: #{a2c_forward.1} parent=0 // pred_check_branch
    %36 = sbr.rel (0) target = $region33
  $region32: #{a2c_forward.1} parent=0 // pred_region
    _
  $region33: #{a2c_forward.1} parent=0 // pred_fallthru
    _
  // Predicated region
  $region34: #{a2c_forward.1} parent=0 // pred_check
    _
  $region35: #{a2c_forward.1} parent=0 // pred_check_branch
    %38 = sbr.rel (0) target = $region37
  $region36: #{a2c_forward.1} parent=0 // pred_region
    _
  $region37: #{a2c_forward.1} parent=0 // pred_fallthru
    _
  // Predicated region
  $region38: #{a2c_forward.1} parent=0 // pred_check
    _
  $region39: #{a2c_forward.1} parent=0 // pred_check_branch
    %40 = sbr.rel (0) target = $region41
  $region40: #{a2c_forward.1} parent=0 // pred_region
    _
  $region41: #{a2c_forward.1} parent=0 // pred_fallthru
    _
  // Predicated region
  $region42: #{a2c_forward.1} parent=0 // pred_check
    _
  $region43: #{a2c_forward.1} parent=0 // pred_check_branch
    %42 = sbr.rel (0) target = $region45
  $region44: #{a2c_forward.1} parent=0 // pred_region
    _
  $region45: #{a2c_forward.1} parent=0 // pred_fallthru
    _
  // Predicated region
  $region46: #{a2c_forward.1} parent=0 // pred_check
    _
  $region47: #{a2c_forward.1} parent=0 // pred_check_branch
    %44 = sbr.rel (0) target = $region49
  $region48: #{a2c_forward.1} parent=0 // pred_region
    _
  $region49: #{a2c_forward.1} parent=0 // pred_fallthru
    _
  // Predicated region
  $region50: #{a2c_forward.1} parent=0 // pred_check
    _
  $region51: #{a2c_forward.1} parent=0 // pred_check_branch
    %46 = sbr.rel (0) target = $region53
  $region52: #{a2c_forward.1} parent=0 // pred_region
    _
  $region53: #{a2c_forward.1} parent=0 // pred_fallthru
    _
  %v47 = vld [vmem:[%s0] sm:$0xff]
  %v48 = vld [vmem:[%s0 + $0x8] sm:$0xff]
  %v49 = vld [vmem:[%s0 + $0x10] sm:$0xff]
  %v50 = vld [vmem:[%s0 + $0x18] sm:$0xff]
  %v51 = vld [vmem:[%s0 + $0x20] sm:$0xff]
  %v52 = vld [vmem:[%s0 + $0x28] sm:$0xff]
  %v53 = vld [vmem:[%s0 + $0x30] sm:$0xff]
  %v54 = vld [vmem:[%s0 + $0x38] sm:$0xff]
  %v55 = vld [vmem:[%s4] sm:$0xf]
  %v56 = vld [vmem:[%s5] sm:$0x1]
  %v58 = vlaneseq
  %v59 = vshrl.u32 %v58, 7
  %v60 = vsub.s32 0, %v59
  %v61 = vrot.slane %v56, %v60
  %vm63 = vcmask 31744
  %v65 = vsel %vm63, %v47, 0
  %v68 = vsel %vm63, %v48, 0
  %v71 = vsel %vm63, %v49, 0
  %v74 = vsel %vm63, %v50, 0
  %v77 = vsel %vm63, %v51, 0
  %v80 = vsel %vm63, %v52, 0
  %v83 = vsel %vm63, %v53, 0
  %v86 = vsel %vm63, %v54, 0
  %vm88 = vcmask 1043456
  %v90 = vsel %vm88, %v55, 0
  %92 = vmatprep.subr.mxu0 0.0
  %93 = vmatpush1.msra.mxu0 %v90
  %94 = vmatprep.subr.mxu0 0.0
  %95 = vmatpush1.msra.mxu0 0.0
  %96 = vmatprep.subr.mxu0 0.0
  %97 = vmatpush1.msra.mxu0 0.0
  %98 = vmatprep.subr.mxu0 0.0
  %99 = vmatpush1.msra.mxu0 0.0
  %100 = vmatprep.subr.mxu0 0.0
  %101 = vmatpush1.msra.mxu0 0.0
  %102 = vmatprep.subr.mxu0 0.0
  %103 = vmatpush1.msra.mxu0 0.0
  %104 = vmatprep.subr.mxu0 0.0
  %105 = vmatpush1.msra.mxu0 0.0
  %106 = vmatprep.subr.mxu0 0.0
  %107 = vmatpush1.msra.mxu0 0.0
  %108 = vmatprep.subr.mxu0 0.0
  %109 = vmatpush1.msra.mxu0 0.0
  %110 = vmatprep.subr.mxu0 0.0
  %111 = vmatpush1.msra.mxu0 0.0
  %112 = vmatprep.subr.mxu0 0.0
  %113 = vmatpush1.msra.mxu0 0.0
  %114 = vmatprep.subr.mxu0 0.0
  %115 = vmatpush1.msra.mxu0 0.0
  %116 = vmatprep.subr.mxu0 0.0
  %117 = vmatpush1.msra.mxu0 0.0
  %118 = vmatprep.subr.mxu0 0.0
  %119 = vmatpush1.msra.mxu0 0.0
  %120 = vmatprep.subr.mxu0 0.0
  %121 = vmatpush1.msra.mxu0 0.0
  %122 = vmatprep.subr.mxu0 0.0
  %123 = vmatpush1.msra.mxu0 0.0
  %124 = vmatprep.subr.mxu0 0.0
  %125 = vmatpush1.msra.mxu0 0.0
  %126 = vmatprep.subr.mxu0 0.0
  %127 = vmatpush1.msra.mxu0 0.0
  %128 = vmatprep.subr.mxu0 0.0
  %129 = vmatpush1.msra.mxu0 0.0
  %130 = vmatprep.subr.mxu0 0.0
  %131 = vmatpush1.msra.mxu0 0.0
  %132 = vmatprep.subr.mxu0 0.0
  %133 = vmatpush1.msra.mxu0 0.0
  %134 = vmatprep.subr.mxu0 0.0
  %135 = vmatpush1.msra.mxu0 0.0
  %136 = vmatprep.subr.mxu0 0.0
  %137 = vmatpush1.msra.mxu0 0.0
  %138 = vmatprep.subr.mxu0 0.0
  %139 = vmatpush1.msra.mxu0 0.0
  %140 = vmatprep.subr.mxu0 0.0
  %141 = vmatpush1.msra.mxu0 0.0
  %142 = vmatprep.subr.mxu0 0.0
  %143 = vmatpush1.msra.mxu0 0.0
  %144 = vmatprep.subr.mxu0 0.0
  %145 = vmatpush1.msra.mxu0 0.0
  %146 = vmatprep.subr.mxu0 0.0
  %147 = vmatpush1.msra.mxu0 0.0
  %148 = vmatprep.subr.mxu0 0.0
  %149 = vmatpush1.msra.mxu0 0.0
  %150 = vmatprep.subr.mxu0 0.0
  %151 = vmatpush1.msra.mxu0 0.0
  %152 = vmatprep.subr.mxu0 0.0
  %153 = vmatpush1.msra.mxu0 0.0
  %154 = vmatprep.subr.mxu0 0.0
  %155 = vmatpush1.msra.mxu0 0.0
  %156 = vmatprep.mubr.f32.mxu0 0.0
  %157 = vmatmul.mubr.f32.gmra.mrb[0].mxu0 %v65
  %v158 = vpop.f32.mrb[0].mxu0
  %v159 = vadd.f32 %v61, %v158
  %v160 = vpop.f32.mrb[0].mxu0
  %161 = vmatprep.mubr.f32.mxu0 0.0
  %162 = vmatmul.mubr.f32.gmra.mrb[0].mxu0 %v68
  %v163 = vpop.f32.mrb[0].mxu0
  %v164 = vadd.f32 %v61, %v163
  %v165 = vpop.f32.mrb[0].mxu0
  %166 = vmatprep.mubr.f32.mxu0 0.0
  %167 = vmatmul.mubr.f32.gmra.mrb[0].mxu0 %v71
  %v168 = vpop.f32.mrb[0].mxu0
  %v169 = vadd.f32 %v61, %v168
  %v170 = vpop.f32.mrb[0].mxu0
  %171 = vmatprep.mubr.f32.mxu0 0.0
  %172 = vmatmul.mubr.f32.gmra.mrb[0].mxu0 %v74
  %v173 = vpop.f32.mrb[0].mxu0
  %v174 = vadd.f32 %v61, %v173
  %v175 = vpop.f32.mrb[0].mxu0
  %176 = vmatprep.mubr.f32.mxu0 0.0
  %177 = vmatmul.mubr.f32.gmra.mrb[0].mxu0 %v77
  %v178 = vpop.f32.mrb[0].mxu0
  %v179 = vadd.f32 %v61, %v178
  %v180 = vpop.f32.mrb[0].mxu0
  %181 = vmatprep.mubr.f32.mxu0 0.0
  %182 = vmatmul.mubr.f32.gmra.mrb[0].mxu0 %v80
  %v183 = vpop.f32.mrb[0].mxu0
  %v184 = vadd.f32 %v61, %v183
  %v185 = vpop.f32.mrb[0].mxu0
  %186 = vmatprep.mubr.f32.mxu0 0.0
  %187 = vmatmul.mubr.f32.gmra.mrb[0].mxu0 %v83
  %v188 = vpop.f32.mrb[0].mxu0
  %v189 = vadd.f32 %v61, %v188
  %v190 = vpop.f32.mrb[0].mxu0
  %191 = vmatprep.mubr.f32.mxu0 0.0
  %192 = vmatmul.mubr.f32.gmra.mrb[0].mxu0 %v86
  %v193 = vpop.f32.mrb[0].mxu0
  %v194 = vadd.f32 %v61, %v193
  %v195 = vpop.f32.mrb[0].mxu0
  %196 = vdwg.mxu0
  %v197 = vtanh.pop %v159
  %v198 = vtanh.pop %v164
  %v199 = vtanh.pop %v169
  %v200 = vtanh.pop %v174
  %v201 = vtanh.pop %v179
  %v202 = vtanh.pop %v184
  %v203 = vtanh.pop %v189
  %v204 = vtanh.pop %v194
  %v205 = vld [vmem:[%s6] sm:$0xff]
  %v206 = vld [vmem:[%s6 + $0x8] sm:$0xff]
  %v207 = vld [vmem:[%s6 + $0x10] sm:$0xff]
  %v208 = vld [vmem:[%s6 + $0x18] sm:$0xff]
  %v209 = vld [vmem:[%s6 + $0x20] sm:$0xff]
  %v210 = vld [vmem:[%s6 + $0x28] sm:$0xff]
  %v211 = vld [vmem:[%s6 + $0x30] sm:$0xff]
  %v212 = vld [vmem:[%s6 + $0x38] sm:$0xff]
  %v213 = vld [vmem:[%s6 + $0x40] sm:$0xff]
  %v214 = vld [vmem:[%s6 + $0x48] sm:$0xff]
  %v215 = vld [vmem:[%s6 + $0x50] sm:$0xff]
  %v216 = vld [vmem:[%s6 + $0x58] sm:$0xff]
  %v217 = vld [vmem:[%s6 + $0x60] sm:$0xff]
  %v218 = vld [vmem:[%s6 + $0x68] sm:$0xff]
  %v219 = vld [vmem:[%s6 + $0x70] sm:$0xff]
  %v220 = vld [vmem:[%s6 + $0x78] sm:$0xff]
  %v221 = vld [vmem:[%s7] sm:$0x1]
  %v223 = vlaneseq
  %v224 = vshrl.u32 %v223, 7
  %v225 = vsub.s32 0, %v224
  %v226 = vrot.slane %v221, %v225
  %228 = vmatprep.subr.mxu0 0.0
  %229 = vmatpush1.msra.mxu0 %v205
  %230 = vmatprep.subr.mxu0 0.0
  %231 = vmatpush1.msra.mxu0 %v206
  %232 = vmatprep.subr.mxu0 0.0
  %233 = vmatpush1.msra.mxu0 %v207
  %234 = vmatprep.subr.mxu0 0.0
  %235 = vmatpush1.msra.mxu0 %v208
  %236 = vmatprep.subr.mxu0 0.0
  %237 = vmatpush1.msra.mxu0 %v209
  %238 = vmatprep.subr.mxu0 0.0
  %239 = vmatpush1.msra.mxu0 %v210
  %240 = vmatprep.subr.mxu0 0.0
  %241 = vmatpush1.msra.mxu0 %v211
  %242 = vmatprep.subr.mxu0 0.0
  %243 = vmatpush1.msra.mxu0 %v212
  %244 = vmatprep.subr.mxu0 0.0
  %245 = vmatpush1.msra.mxu0 %v213
  %246 = vmatprep.subr.mxu0 0.0
  %247 = vmatpush1.msra.mxu0 %v214
  %248 = vmatprep.subr.mxu0 0.0
  %249 = vmatpush1.msra.mxu0 %v215
  %250 = vmatprep.subr.mxu0 0.0
  %251 = vmatpush1.msra.mxu0 %v216
  %252 = vmatprep.subr.mxu0 0.0
  %253 = vmatpush1.msra.mxu0 %v217
  %254 = vmatprep.subr.mxu0 0.0
  %255 = vmatpush1.msra.mxu0 %v218
  %256 = vmatprep.subr.mxu0 0.0
  %257 = vmatpush1.msra.mxu0 %v219
  %258 = vmatprep.subr.mxu0 0.0
  %259 = vmatpush1.msra.mxu0 %v220
  %260 = vmatprep.subr.mxu0 0.0
  %261 = vmatpush1.msra.mxu0 0.0
  %262 = vmatprep.subr.mxu0 0.0
  %263 = vmatpush1.msra.mxu0 0.0
  %264 = vmatprep.subr.mxu0 0.0
  %265 = vmatpush1.msra.mxu0 0.0
  %266 = vmatprep.subr.mxu0 0.0
  %267 = vmatpush1.msra.mxu0 0.0
  %268 = vmatprep.subr.mxu0 0.0
  %269 = vmatpush1.msra.mxu0 0.0
  %270 = vmatprep.subr.mxu0 0.0
  %271 = vmatpush1.msra.mxu0 0.0
  %272 = vmatprep.subr.mxu0 0.0
  %273 = vmatpush1.msra.mxu0 0.0
  %274 = vmatprep.subr.mxu0 0.0
  %275 = vmatpush1.msra.mxu0 0.0
  %276 = vmatprep.subr.mxu0 0.0
  %277 = vmatpush1.msra.mxu0 0.0
  %278 = vmatprep.subr.mxu0 0.0
  %279 = vmatpush1.msra.mxu0 0.0
  %280 = vmatprep.subr.mxu0 0.0
  %281 = vmatpush1.msra.mxu0 0.0
  %282 = vmatprep.subr.mxu0 0.0
  %283 = vmatpush1.msra.mxu0 0.0
  %284 = vmatprep.subr.mxu0 0.0
  %285 = vmatpush1.msra.mxu0 0.0
  %286 = vmatprep.subr.mxu0 0.0
  %287 = vmatpush1.msra.mxu0 0.0
  %288 = vmatprep.subr.mxu0 0.0
  %289 = vmatpush1.msra.mxu0 0.0
  %290 = vmatprep.subr.mxu0 0.0
  %291 = vmatpush1.msra.mxu0 0.0
  %292 = vmatprep.mubr.f32.mxu0 0.0
  %293 = vmatmul.mubr.f32.gmra.mrb[0].mxu0 %v197
  %v294 = vpop.f32.mrb[0].mxu0
  %v295 = vadd.f32 %v226, %v294
  %v296 = vpop.f32.mrb[0].mxu0
  %297 = vmatprep.mubr.f32.mxu0 0.0
  %298 = vmatmul.mubr.f32.gmra.mrb[0].mxu0 %v198
  %v299 = vpop.f32.mrb[0].mxu0
  %v300 = vadd.f32 %v226, %v299
  %v301 = vpop.f32.mrb[0].mxu0
  %302 = vmatprep.mubr.f32.mxu0 0.0
  %303 = vmatmul.mubr.f32.gmra.mrb[0].mxu0 %v199
  %v304 = vpop.f32.mrb[0].mxu0
  %v305 = vadd.f32 %v226, %v304
  %v306 = vpop.f32.mrb[0].mxu0
  %307 = vmatprep.mubr.f32.mxu0 0.0
  %308 = vmatmul.mubr.f32.gmra.mrb[0].mxu0 %v200
  %v309 = vpop.f32.mrb[0].mxu0
  %v310 = vadd.f32 %v226, %v309
  %v311 = vpop.f32.mrb[0].mxu0
  %312 = vmatprep.mubr.f32.mxu0 0.0
  %313 = vmatmul.mubr.f32.gmra.mrb[0].mxu0 %v201
  %v314 = vpop.f32.mrb[0].mxu0
  %v315 = vadd.f32 %v226, %v314
  %v316 = vpop.f32.mrb[0].mxu0
  %317 = vmatprep.mubr.f32.mxu0 0.0
  %318 = vmatmul.mubr.f32.gmra.mrb[0].mxu0 %v202
  %v319 = vpop.f32.mrb[0].mxu0
  %v320 = vadd.f32 %v226, %v319
  %v321 = vpop.f32.mrb[0].mxu0
  %322 = vmatprep.mubr.f32.mxu0 0.0
  %323 = vmatmul.mubr.f32.gmra.mrb[0].mxu0 %v203
  %v324 = vpop.f32.mrb[0].mxu0
  %v325 = vadd.f32 %v226, %v324
  %v326 = vpop.f32.mrb[0].mxu0
  %327 = vmatprep.mubr.f32.mxu0 0.0
  %328 = vmatmul.mubr.f32.gmra.mrb[0].mxu0 %v204
  %v329 = vpop.f32.mrb[0].mxu0
  %v330 = vadd.f32 %v226, %v329
  %v331 = vpop.f32.mrb[0].mxu0
  %332 = vdwg.mxu0
  %v333 = vtanh.pop %v295
  %v334 = vtanh.pop %v300
  %v335 = vtanh.pop %v305
  %v336 = vtanh.pop %v310
  %v337 = vtanh.pop %v315
  %v338 = vtanh.pop %v320
  %v339 = vtanh.pop %v325
  %v340 = vtanh.pop %v330
  %v341 = vld [vmem:[%s8] sm:$0xff]
  %v342 = vld [vmem:[%s8 + $0x8] sm:$0xff]
  %v343 = vld [vmem:[%s8 + $0x10] sm:$0xff]
  %v344 = vld [vmem:[%s8 + $0x18] sm:$0xff]
  %v345 = vld [vmem:[%s10] sm:$0x1]
  %v347 = vlaneseq
  %v348 = vshrl.u32 %v347, 7
  %v349 = vsub.s32 0, %v348
  %v350 = vrot.slane %v345, %v349
  %vm352 = vcmask 261120
  %v354 = vsel %vm352, %v333, 0
  %v357 = vsel %vm352, %v334, 0
  %v360 = vsel %vm352, %v335, 0
  %v363 = vsel %vm352, %v336, 0
  %v366 = vsel %vm352, %v337, 0
  %v369 = vsel %vm352, %v338, 0
  %v372 = vsel %vm352, %v339, 0
  %v375 = vsel %vm352, %v340, 0
  %377 = vmatprep.subr.mxu0 0.0
  %378 = vmatpush1.msra.mxu0 %v341
  %379 = vmatprep.subr.mxu0 0.0
  %380 = vmatpush1.msra.mxu0 %v342
  %381 = vmatprep.subr.mxu0 0.0
  %382 = vmatpush1.msra.mxu0 %v343
  %383 = vmatprep.subr.mxu0 0.0
  %384 = vmatpush1.msra.mxu0 %v344
  %385 = vmatprep.subr.mxu0 0.0
  %386 = vmatpush1.msra.mxu0 0.0
  %387 = vmatprep.subr.mxu0 0.0
  %388 = vmatpush1.msra.mxu0 0.0
  %389 = vmatprep.subr.mxu0 0.0
  %390 = vmatpush1.msra.mxu0 0.0
  %391 = vmatprep.subr.mxu0 0.0
  %392 = vmatpush1.msra.mxu0 0.0
  %393 = vmatprep.subr.mxu0 0.0
  %394 = vmatpush1.msra.mxu0 0.0
  %395 = vmatprep.subr.mxu0 0.0
  %396 = vmatpush1.msra.mxu0 0.0
  %397 = vmatprep.subr.mxu0 0.0
  %398 = vmatpush1.msra.mxu0 0.0
  %399 = vmatprep.subr.mxu0 0.0
  %400 = vmatpush1.msra.mxu0 0.0
  %401 = vmatprep.subr.mxu0 0.0
  %402 = vmatpush1.msra.mxu0 0.0
  %403 = vmatprep.subr.mxu0 0.0
  %404 = vmatpush1.msra.mxu0 0.0
  %405 = vmatprep.subr.mxu0 0.0
  %406 = vmatpush1.msra.mxu0 0.0
  %407 = vmatprep.subr.mxu0 0.0
  %408 = vmatpush1.msra.mxu0 0.0
  %409 = vmatprep.subr.mxu0 0.0
  %410 = vmatpush1.msra.mxu0 0.0
  %411 = vmatprep.subr.mxu0 0.0
  %412 = vmatpush1.msra.mxu0 0.0
  %413 = vmatprep.subr.mxu0 0.0
  %414 = vmatpush1.msra.mxu0 0.0
  %415 = vmatprep.subr.mxu0 0.0
  %416 = vmatpush1.msra.mxu0 0.0
  %417 = vmatprep.subr.mxu0 0.0
  %418 = vmatpush1.msra.mxu0 0.0
  %419 = vmatprep.subr.mxu0 0.0
  %420 = vmatpush1.msra.mxu0 0.0
  %421 = vmatprep.subr.mxu0 0.0
  %422 = vmatpush1.msra.mxu0 0.0
  %423 = vmatprep.subr.mxu0 0.0
  %424 = vmatpush1.msra.mxu0 0.0
  %425 = vmatprep.subr.mxu0 0.0
  %426 = vmatpush1.msra.mxu0 0.0
  %427 = vmatprep.subr.mxu0 0.0
  %428 = vmatpush1.msra.mxu0 0.0
  %429 = vmatprep.subr.mxu0 0.0
  %430 = vmatpush1.msra.mxu0 0.0
  %431 = vmatprep.subr.mxu0 0.0
  %432 = vmatpush1.msra.mxu0 0.0
  %433 = vmatprep.subr.mxu0 0.0
  %434 = vmatpush1.msra.mxu0 0.0
  %435 = vmatprep.subr.mxu0 0.0
  %436 = vmatpush1.msra.mxu0 0.0
  %437 = vmatprep.subr.mxu0 0.0
  %438 = vmatpush1.msra.mxu0 0.0
  %439 = vmatprep.subr.mxu0 0.0
  %440 = vmatpush1.msra.mxu0 0.0
  %441 = vmatprep.mubr.f32.mxu0 0.0
  %442 = vmatmul.mubr.f32.gmra.mrb[0].mxu0 %v354
  %v443 = vpop.f32.mrb[0].mxu0
  %v444 = vadd.f32 %v350, %v443
  %v445 = vpop.f32.mrb[0].mxu0
  %446 = vmatprep.mubr.f32.mxu0 0.0
  %447 = vmatmul.mubr.f32.gmra.mrb[0].mxu0 %v357
  %v448 = vpop.f32.mrb[0].mxu0
  %v449 = vadd.f32 %v350, %v448
  %v450 = vpop.f32.mrb[0].mxu0
  %451 = vmatprep.mubr.f32.mxu0 0.0
  %452 = vmatmul.mubr.f32.gmra.mrb[0].mxu0 %v360
  %v453 = vpop.f32.mrb[0].mxu0
  %v454 = vadd.f32 %v350, %v453
  %v455 = vpop.f32.mrb[0].mxu0
  %456 = vmatprep.mubr.f32.mxu0 0.0
  %457 = vmatmul.mubr.f32.gmra.mrb[0].mxu0 %v363
  %v458 = vpop.f32.mrb[0].mxu0
  %v459 = vadd.f32 %v350, %v458
  %v460 = vpop.f32.mrb[0].mxu0
  %461 = vmatprep.mubr.f32.mxu0 0.0
  %462 = vmatmul.mubr.f32.gmra.mrb[0].mxu0 %v366
  %v463 = vpop.f32.mrb[0].mxu0
  %v464 = vadd.f32 %v350, %v463
  %v465 = vpop.f32.mrb[0].mxu0
  %466 = vmatprep.mubr.f32.mxu0 0.0
  %467 = vmatmul.mubr.f32.gmra.mrb[0].mxu0 %v369
  %v468 = vpop.f32.mrb[0].mxu0
  %v469 = vadd.f32 %v350, %v468
  %v470 = vpop.f32.mrb[0].mxu0
  %471 = vmatprep.mubr.f32.mxu0 0.0
  %472 = vmatmul.mubr.f32.gmra.mrb[0].mxu0 %v372
  %v473 = vpop.f32.mrb[0].mxu0
  %v474 = vadd.f32 %v350, %v473
  %v475 = vpop.f32.mrb[0].mxu0
  %476 = vmatprep.mubr.f32.mxu0 0.0
  %477 = vmatmul.mubr.f32.gmra.mrb[0].mxu0 %v375
  %v478 = vpop.f32.mrb[0].mxu0
  %v479 = vadd.f32 %v350, %v478
  %v480 = vpop.f32.mrb[0].mxu0
  %481 = vdwg.mxu0
  %482 = vst [vmem:[#allocation2] sm:$0xff] %v444
  %483 = vst [vmem:[#allocation2 + $0x8] sm:$0xff] %v449
  %484 = vst [vmem:[#allocation2 + $0x10] sm:$0xff] %v454
  %485 = vst [vmem:[#allocation2 + $0x18] sm:$0xff] %v459
  %486 = vst [vmem:[#allocation2 + $0x20] sm:$0xff] %v464
  %487 = vst [vmem:[#allocation2 + $0x28] sm:$0xff] %v469
  %488 = vst [vmem:[#allocation2 + $0x30] sm:$0xff] %v474
  %489 = vst [vmem:[#allocation2 + $0x38] sm:$0xff] %v479
  %v490 = vld [vmem:[%s9] sm:$0xff]
  %v491 = vld [vmem:[%s9 + $0x8] sm:$0xff]
  %v492 = vld [vmem:[%s9 + $0x10] sm:$0xff]
  %v493 = vld [vmem:[%s9 + $0x18] sm:$0xff]
  %v494 = vld [vmem:[%s1] sm:$0xff]
  %v495 = vld [vmem:[%s1 + $0x8] sm:$0xff]
  %v496 = vld [vmem:[%s1 + $0x10] sm:$0xff]
  %v497 = vld [vmem:[%s1 + $0x18] sm:$0xff]
  %v498 = vld [vmem:[%s1 + $0x20] sm:$0xff]
  %v499 = vld [vmem:[%s1 + $0x28] sm:$0xff]
  %v500 = vld [vmem:[%s1 + $0x30] sm:$0xff]
  %v501 = vld [vmem:[%s1 + $0x38] sm:$0xff]
  %v502 = vlaneseq
  %v503 = vand.u32 %v502, 127
  %vm504 = vcmp.ge.s32.totalorder %v503, 64
  %vm505 = vcmp.lt.s32.totalorder %v503, 96
  %vm506 = vmand %vm504, %vm505
  %v507 = vld [vmem:[%s2] sm:$0xff]
  %v508 = vld [vmem:[%s3] sm:$0xff]
  %510 = vset.pattern.permute.xlu0 0
  %511 = vperm.xlu0 %510, %v494
  %v512 = vpop.permute.xlu0 %511
  %v514 = vmul.f32 %v512, %v507
  %v515 = vmul.f32 %v512, %v508
  %v516 = vld [vmem:[#allocation2] sm:$0xff]
  %v518 = vsel %vm352, %v514, 0
  %520 = vmatprep.subr.mxu0 0.0
  %521 = vmatpush1.msra.mxu0 %v490
  %522 = vmatprep.subr.mxu0 0.0
  %523 = vmatpush1.msra.mxu0 %v491
  %524 = vmatprep.subr.mxu0 0.0
  %525 = vmatpush1.msra.mxu0 %v492
  %526 = vmatprep.subr.mxu0 0.0
  %527 = vmatpush1.msra.mxu0 %v493
  %528 = vmatprep.subr.mxu0 0.0
  %529 = vmatpush1.msra.mxu0 0.0
  %530 = vmatprep.subr.mxu0 0.0
  %531 = vmatpush1.msra.mxu0 0.0
  %532 = vmatprep.subr.mxu0 0.0
  %533 = vmatpush1.msra.mxu0 0.0
  %534 = vmatprep.subr.mxu0 0.0
  %535 = vmatpush1.msra.mxu0 0.0
  %536 = vmatprep.subr.mxu0 0.0
  %537 = vmatpush1.msra.mxu0 0.0
  %538 = vmatprep.subr.mxu0 0.0
  %539 = vmatpush1.msra.mxu0 0.0
  %540 = vmatprep.subr.mxu0 0.0
  %541 = vmatpush1.msra.mxu0 0.0
  %542 = vmatprep.subr.mxu0 0.0
  %543 = vmatpush1.msra.mxu0 0.0
  %544 = vmatprep.subr.mxu0 0.0
  %545 = vmatpush1.msra.mxu0 0.0
  %546 = vmatprep.subr.mxu0 0.0
  %547 = vmatpush1.msra.mxu0 0.0
  %548 = vmatprep.subr.mxu0 0.0
  %549 = vmatpush1.msra.mxu0 0.0
  %550 = vmatprep.subr.mxu0 0.0
  %551 = vmatpush1.msra.mxu0 0.0
  %552 = vmatprep.subr.mxu0 0.0
  %553 = vmatpush1.msra.mxu0 0.0
  %554 = vmatprep.subr.mxu0 0.0
  %555 = vmatpush1.msra.mxu0 0.0
  %556 = vmatprep.subr.mxu0 0.0
  %557 = vmatpush1.msra.mxu0 0.0
  %558 = vmatprep.subr.mxu0 0.0
  %559 = vmatpush1.msra.mxu0 0.0
  %560 = vmatprep.subr.mxu0 0.0
  %561 = vmatpush1.msra.mxu0 0.0
  %562 = vmatprep.subr.mxu0 0.0
  %563 = vmatpush1.msra.mxu0 0.0
  %564 = vmatprep.subr.mxu0 0.0
  %565 = vmatpush1.msra.mxu0 0.0
  %566 = vmatprep.subr.mxu0 0.0
  %567 = vmatpush1.msra.mxu0 0.0
  %568 = vmatprep.subr.mxu0 0.0
  %569 = vmatpush1.msra.mxu0 0.0
  %570 = vmatprep.subr.mxu0 0.0
  %571 = vmatpush1.msra.mxu0 0.0
  %572 = vmatprep.subr.mxu0 0.0
  %573 = vmatpush1.msra.mxu0 0.0
  %574 = vmatprep.subr.mxu0 0.0
  %575 = vmatpush1.msra.mxu0 0.0
  %576 = vmatprep.subr.mxu0 0.0
  %577 = vmatpush1.msra.mxu0 0.0
  %578 = vmatprep.subr.mxu0 0.0
  %579 = vmatpush1.msra.mxu0 0.0
  %580 = vmatprep.subr.mxu0 0.0
  %581 = vmatpush1.msra.mxu0 0.0
  %582 = vmatprep.subr.mxu0 0.0
  %583 = vmatpush1.msra.mxu0 0.0
  %584 = vmatprep.mubr.f32.mxu0 0.0
  %585 = vmatmul.mubr.f32.gmra.mrb[0].mxu0 %v518
  %v586 = vpop.f32.mrb[0].mxu0
  %v587 = vadd.f32 0.0, %v586
  %v588 = vpop.f32.mrb[0].mxu0
  %589 = vdwg.mxu0
  %v590 = vadd.f32 %v516, %v587
  %v591 = vmul.f32 %v590, 0.5
  %v592 = vsel %vm506, %v590, %v591
  %v593 = vtanh.pop %v592
  %v594 = vmul.f32 %v593, 0.5
  %v595 = vadd.f32 %v594, 0.5
  %v596 = vsel %vm506, %v593, %v595
  %598 = vrot.lane.b32.xlu0 %v515, 32
  %v599 = vpop.permute.xlu0 %598
  %v601 = vmul.f32 %v596, %v599
  %603 = vrot.lane.b32.xlu0 %v596, 64
  %v604 = vpop.permute.xlu0 %603
  %v606 = vmul.f32 %v596, %v604
  %608 = vrot.lane.b32.xlu0 %v606, 32
  %v609 = vpop.permute.xlu0 %608
  %v611 = vadd.f32 %v601, %v609
  %v612 = vtanh.pop %v611
  %614 = vrot.lane.b32.xlu0 %v612, 64
  %v615 = vpop.permute.xlu0 %614
  %v617 = vmul.f32 %v596, %v615
  %619 = vrot.lane.b32.xlu0 %v617, 32
  %v620 = vpop.permute.xlu0 %619
  %622 = vst.msk [vmem:[#allocation3] sm:$0xff] %vm352, %v620
  %624 = vset.pattern.permute.xlu0 0
  %625 = vperm.xlu0 %624, %v495
  %v626 = vpop.permute.xlu0 %625
  %v628 = vmul.f32 %v626, %v617
  %v629 = vmul.f32 %v626, %v611
  %s630 = scalar_lea.vmem [#allocation2], 8
  %v631 = vld [vmem:[%s630] sm:$0xff]
  %633 = vrot.lane.b32.xlu0 %v628, 32
  %v634 = vpop.permute.xlu0 %633
  %v635 = vsel %vm352, %v634, 0
  %637 = vmatprep.subr.mxu0 0.0
  %638 = vmatpush1.msra.mxu0 %v490
  %639 = vmatprep.subr.mxu0 0.0
  %640 = vmatpush1.msra.mxu0 %v491
  %641 = vmatprep.subr.mxu0 0.0
  %642 = vmatpush1.msra.mxu0 %v492
  %643 = vmatprep.subr.mxu0 0.0
  %644 = vmatpush1.msra.mxu0 %v493
  %645 = vmatprep.subr.mxu0 0.0
  %646 = vmatpush1.msra.mxu0 0.0
  %647 = vmatprep.subr.mxu0 0.0
  %648 = vmatpush1.msra.mxu0 0.0
  %649 = vmatprep.subr.mxu0 0.0
  %650 = vmatpush1.msra.mxu0 0.0
  %651 = vmatprep.subr.mxu0 0.0
  %652 = vmatpush1.msra.mxu0 0.0
  %653 = vmatprep.subr.mxu0 0.0
  %654 = vmatpush1.msra.mxu0 0.0
  %655 = vmatprep.subr.mxu0 0.0
  %656 = vmatpush1.msra.mxu0 0.0
  %657 = vmatprep.subr.mxu0 0.0
  %658 = vmatpush1.msra.mxu0 0.0
  %659 = vmatprep.subr.mxu0 0.0
  %660 = vmatpush1.msra.mxu0 0.0
  %661 = vmatprep.subr.mxu0 0.0
  %662 = vmatpush1.msra.mxu0 0.0
  %663 = vmatprep.subr.mxu0 0.0
  %664 = vmatpush1.msra.mxu0 0.0
  %665 = vmatprep.subr.mxu0 0.0
  %666 = vmatpush1.msra.mxu0 0.0
  %667 = vmatprep.subr.mxu0 0.0
  %668 = vmatpush1.msra.mxu0 0.0
  %669 = vmatprep.subr.mxu0 0.0
  %670 = vmatpush1.msra.mxu0 0.0
  %671 = vmatprep.subr.mxu0 0.0
  %672 = vmatpush1.msra.mxu0 0.0
  %673 = vmatprep.subr.mxu0 0.0
  %674 = vmatpush1.msra.mxu0 0.0
  %675 = vmatprep.subr.mxu0 0.0
  %676 = vmatpush1.msra.mxu0 0.0
  %677 = vmatprep.subr.mxu0 0.0
  %678 = vmatpush1.msra.mxu0 0.0
  %679 = vmatprep.subr.mxu0 0.0
  %680 = vmatpush1.msra.mxu0 0.0
  %681 = vmatprep.subr.mxu0 0.0
  %682 = vmatpush1.msra.mxu0 0.0
  %683 = vmatprep.subr.mxu0 0.0
  %684 = vmatpush1.msra.mxu0 0.0
  %685 = vmatprep.subr.mxu0 0.0
  %686 = vmatpush1.msra.mxu0 0.0
  %687 = vmatprep.subr.mxu0 0.0
  %688 = vmatpush1.msra.mxu0 0.0
  %689 = vmatprep.subr.mxu0 0.0
  %690 = vmatpush1.msra.mxu0 0.0
  %691 = vmatprep.subr.mxu0 0.0
  %692 = vmatpush1.msra.mxu0 0.0
  %693 = vmatprep.subr.mxu0 0.0
  %694 = vmatpush1.msra.mxu0 0.0
  %695 = vmatprep.subr.mxu0 0.0
  %696 = vmatpush1.msra.mxu0 0.0
  %697 = vmatprep.subr.mxu0 0.0
  %698 = vmatpush1.msra.mxu0 0.0
  %699 = vmatprep.subr.mxu0 0.0
  %700 = vmatpush1.msra.mxu0 0.0
  %701 = vmatprep.mubr.f32.mxu0 0.0
  %702 = vmatmul.mubr.f32.gmra.mrb[0].mxu0 %v635
  %v703 = vpop.f32.mrb[0].mxu0
  %v704 = vadd.f32 0.0, %v703
  %v705 = vpop.f32.mrb[0].mxu0
  %706 = vdwg.mxu0
  %v707 = vadd.f32 %v631, %v704
  %v708 = vmul.f32 %v707, 0.5
  %v709 = vsel %vm506, %v707, %v708
  %v710 = vtanh.pop %v709
  %v711 = vmul.f32 %v710, 0.5
  %v712 = vadd.f32 %v711, 0.5
  %v713 = vsel %vm506, %v710, %v712
  %v714 = vmul.f32 %v713, %v629
  %716 = vrot.lane.b32.xlu0 %v713, 64
  %v717 = vpop.permute.xlu0 %716
  %v719 = vmul.f32 %v713, %v717
  %721 = vrot.lane.b32.xlu0 %v719, 32
  %v722 = vpop.permute.xlu0 %721
  %v724 = vadd.f32 %v714, %v722
  %v725 = vtanh.pop %v724
  %727 = vrot.lane.b32.xlu0 %v725, 64
  %v728 = vpop.permute.xlu0 %727
  %v730 = vmul.f32 %v713, %v728
  %732 = vrot.lane.b32.xlu0 %v730, 32
  %v733 = vpop.permute.xlu0 %732
  %s735 = scalar_lea.vmem [#allocation3], 8
  %736 = vst.msk [vmem:[%s735] sm:$0xff] %vm352, %v733
  %738 = vset.pattern.permute.xlu0 0
  %739 = vperm.xlu0 %738, %v496
  %v740 = vpop.permute.xlu0 %739
  %v742 = vmul.f32 %v740, %v730
  %v743 = vmul.f32 %v740, %v724
  %s744 = scalar_lea.vmem [#allocation2], 16
  %v745 = vld [vmem:[%s744] sm:$0xff]
  %747 = vrot.lane.b32.xlu0 %v742, 32
  %v748 = vpop.permute.xlu0 %747
  %v749 = vsel %vm352, %v748, 0
  %751 = vmatprep.subr.mxu0 0.0
  %752 = vmatpush1.msra.mxu0 %v490
  %753 = vmatprep.subr.mxu0 0.0
  %754 = vmatpush1.msra.mxu0 %v491
  %755 = vmatprep.subr.mxu0 0.0
  %756 = vmatpush1.msra.mxu0 %v492
  %757 = vmatprep.subr.mxu0 0.0
  %758 = vmatpush1.msra.mxu0 %v493
  %759 = vmatprep.subr.mxu0 0.0
  %760 = vmatpush1.msra.mxu0 0.0
  %761 = vmatprep.subr.mxu0 0.0
  %762 = vmatpush1.msra.mxu0 0.0
  %763 = vmatprep.subr.mxu0 0.0
  %764 = vmatpush1.msra.mxu0 0.0
  %765 = vmatprep.subr.mxu0 0.0
  %766 = vmatpush1.msra.mxu0 0.0
  %767 = vmatprep.subr.mxu0 0.0
  %768 = vmatpush1.msra.mxu0 0.0
  %769 = vmatprep.subr.mxu0 0.0
  %770 = vmatpush1.msra.mxu0 0.0
  %771 = vmatprep.subr.mxu0 0.0
  %772 = vmatpush1.msra.mxu0 0.0
  %773 = vmatprep.subr.mxu0 0.0
  %774 = vmatpush1.msra.mxu0 0.0
  %775 = vmatprep.subr.mxu0 0.0
  %776 = vmatpush1.msra.mxu0 0.0
  %777 = vmatprep.subr.mxu0 0.0
  %778 = vmatpush1.msra.mxu0 0.0
  %779 = vmatprep.subr.mxu0 0.0
  %780 = vmatpush1.msra.mxu0 0.0
  %781 = vmatprep.subr.mxu0 0.0
  %782 = vmatpush1.msra.mxu0 0.0
  %783 = vmatprep.subr.mxu0 0.0
  %784 = vmatpush1.msra.mxu0 0.0
  %785 = vmatprep.subr.mxu0 0.0
  %786 = vmatpush1.msra.mxu0 0.0
  %787 = vmatprep.subr.mxu0 0.0
  %788 = vmatpush1.msra.mxu0 0.0
  %789 = vmatprep.subr.mxu0 0.0
  %790 = vmatpush1.msra.mxu0 0.0
  %791 = vmatprep.subr.mxu0 0.0
  %792 = vmatpush1.msra.mxu0 0.0
  %793 = vmatprep.subr.mxu0 0.0
  %794 = vmatpush1.msra.mxu0 0.0
  %795 = vmatprep.subr.mxu0 0.0
  %796 = vmatpush1.msra.mxu0 0.0
  %797 = vmatprep.subr.mxu0 0.0
  %798 = vmatpush1.msra.mxu0 0.0
  %799 = vmatprep.subr.mxu0 0.0
  %800 = vmatpush1.msra.mxu0 0.0
  %801 = vmatprep.subr.mxu0 0.0
  %802 = vmatpush1.msra.mxu0 0.0
  %803 = vmatprep.subr.mxu0 0.0
  %804 = vmatpush1.msra.mxu0 0.0
  %805 = vmatprep.subr.mxu0 0.0
  %806 = vmatpush1.msra.mxu0 0.0
  %807 = vmatprep.subr.mxu0 0.0
  %808 = vmatpush1.msra.mxu0 0.0
  %809 = vmatprep.subr.mxu0 0.0
  %810 = vmatpush1.msra.mxu0 0.0
  %811 = vmatprep.subr.mxu0 0.0
  %812 = vmatpush1.msra.mxu0 0.0
  %813 = vmatprep.subr.mxu0 0.0
  %814 = vmatpush1.msra.mxu0 0.0
  %815 = vmatprep.mubr.f32.mxu0 0.0
  %816 = vmatmul.mubr.f32.gmra.mrb[0].mxu0 %v749
  %v817 = vpop.f32.mrb[0].mxu0
  %v818 = vadd.f32 0.0, %v817
  %v819 = vpop.f32.mrb[0].mxu0
  %820 = vdwg.mxu0
  %v821 = vadd.f32 %v745, %v818
  %v822 = vmul.f32 %v821, 0.5
  %v823 = vsel %vm506, %v821, %v822
  %v824 = vtanh.pop %v823
  %v825 = vmul.f32 %v824, 0.5
  %v826 = vadd.f32 %v825, 0.5
  %v827 = vsel %vm506, %v824, %v826
  %v828 = vmul.f32 %v827, %v743
  %830 = vrot.lane.b32.xlu0 %v827, 64
  %v831 = vpop.permute.xlu0 %830
  %v833 = vmul.f32 %v827, %v831
  %835 = vrot.lane.b32.xlu0 %v833, 32
  %v836 = vpop.permute.xlu0 %835
  %v838 = vadd.f32 %v828, %v836
  %v839 = vtanh.pop %v838
  %841 = vrot.lane.b32.xlu0 %v839, 64
  %v842 = vpop.permute.xlu0 %841
  %v844 = vmul.f32 %v827, %v842
  %846 = vrot.lane.b32.xlu0 %v844, 32
  %v847 = vpop.permute.xlu0 %846
  %s849 = scalar_lea.vmem [#allocation3], 16
  %850 = vst.msk [vmem:[%s849] sm:$0xff] %vm352, %v847
  %852 = vset.pattern.permute.xlu0 0
  %853 = vperm.xlu0 %852, %v497
  %v854 = vpop.permute.xlu0 %853
  %v856 = vmul.f32 %v854, %v844
  %v857 = vmul.f32 %v854, %v838
  %s858 = scalar_lea.vmem [#allocation2], 24
  %v859 = vld [vmem:[%s858] sm:$0xff]
  %861 = vrot.lane.b32.xlu0 %v856, 32
  %v862 = vpop.permute.xlu0 %861
  %v863 = vsel %vm352, %v862, 0
  %865 = vmatprep.subr.mxu0 0.0
  %866 = vmatpush1.msra.mxu0 %v490
  %867 = vmatprep.subr.mxu0 0.0
  %868 = vmatpush1.msra.mxu0 %v491
  %869 = vmatprep.subr.mxu0 0.0
  %870 = vmatpush1.msra.mxu0 %v492
  %871 = vmatprep.subr.mxu0 0.0
  %872 = vmatpush1.msra.mxu0 %v493
  %873 = vmatprep.subr.mxu0 0.0
  %874 = vmatpush1.msra.mxu0 0.0
  %875 = vmatprep.subr.mxu0 0.0
  %876 = vmatpush1.msra.mxu0 0.0
  %877 = vmatprep.subr.mxu0 0.0
  %878 = vmatpush1.msra.mxu0 0.0
  %879 = vmatprep.subr.mxu0 0.0
  %880 = vmatpush1.msra.mxu0 0.0
  %881 = vmatprep.subr.mxu0 0.0
  %882 = vmatpush1.msra.mxu0 0.0
  %883 = vmatprep.subr.mxu0 0.0
  %884 = vmatpush1.msra.mxu0 0.0
  %885 = vmatprep.subr.mxu0 0.0
  %886 = vmatpush1.msra.mxu0 0.0
  %887 = vmatprep.subr.mxu0 0.0
  %888 = vmatpush1.msra.mxu0 0.0
  %889 = vmatprep.subr.mxu0 0.0
  %890 = vmatpush1.msra.mxu0 0.0
  %891 = vmatprep.subr.mxu0 0.0
  %892 = vmatpush1.msra.mxu0 0.0
  %893 = vmatprep.subr.mxu0 0.0
  %894 = vmatpush1.msra.mxu0 0.0
  %895 = vmatprep.subr.mxu0 0.0
  %896 = vmatpush1.msra.mxu0 0.0
  %897 = vmatprep.subr.mxu0 0.0
  %898 = vmatpush1.msra.mxu0 0.0
  %899 = vmatprep.subr.mxu0 0.0
  %900 = vmatpush1.msra.mxu0 0.0
  %901 = vmatprep.subr.mxu0 0.0
  %902 = vmatpush1.msra.mxu0 0.0
  %903 = vmatprep.subr.mxu0 0.0
  %904 = vmatpush1.msra.mxu0 0.0
  %905 = vmatprep.subr.mxu0 0.0
  %906 = vmatpush1.msra.mxu0 0.0
  %907 = vmatprep.subr.mxu0 0.0
  %908 = vmatpush1.msra.mxu0 0.0
  %909 = vmatprep.subr.mxu0 0.0
  %910 = vmatpush1.msra.mxu0 0.0
  %911 = vmatprep.subr.mxu0 0.0
  %912 = vmatpush1.msra.mxu0 0.0
  %913 = vmatprep.subr.mxu0 0.0
  %914 = vmatpush1.msra.mxu0 0.0
  %915 = vmatprep.subr.mxu0 0.0
  %916 = vmatpush1.msra.mxu0 0.0
  %917 = vmatprep.subr.mxu0 0.0
  %918 = vmatpush1.msra.mxu0 0.0
  %919 = vmatprep.subr.mxu0 0.0
  %920 = vmatpush1.msra.mxu0 0.0
  %921 = vmatprep.subr.mxu0 0.0
  %922 = vmatpush1.msra.mxu0 0.0
  %923 = vmatprep.subr.mxu0 0.0
  %924 = vmatpush1.msra.mxu0 0.0
  %925 = vmatprep.subr.mxu0 0.0
  %926 = vmatpush1.msra.mxu0 0.0
  %927 = vmatprep.subr.mxu0 0.0
  %928 = vmatpush1.msra.mxu0 0.0
  %929 = vmatprep.mubr.f32.mxu0 0.0
  %930 = vmatmul.mubr.f32.gmra.mrb[0].mxu0 %v863
  %v931 = vpop.f32.mrb[0].mxu0
  %v932 = vadd.f32 0.0, %v931
  %v933 = vpop.f32.mrb[0].mxu0
  %934 = vdwg.mxu0
  %v935 = vadd.f32 %v859, %v932
  %v936 = vmul.f32 %v935, 0.5
  %v937 = vsel %vm506, %v935, %v936
  %v938 = vtanh.pop %v937
  %v939 = vmul.f32 %v938, 0.5
  %v940 = vadd.f32 %v939, 0.5
  %v941 = vsel %vm506, %v938, %v940
  %v942 = vmul.f32 %v941, %v857
  %944 = vrot.lane.b32.xlu0 %v941, 64
  %v945 = vpop.permute.xlu0 %944
  %v947 = vmul.f32 %v941, %v945
  %949 = vrot.lane.b32.xlu0 %v947, 32
  %v950 = vpop.permute.xlu0 %949
  %v952 = vadd.f32 %v942, %v950
  %v953 = vtanh.pop %v952
  %955 = vrot.lane.b32.xlu0 %v953, 64
  %v956 = vpop.permute.xlu0 %955
  %v958 = vmul.f32 %v941, %v956
  %960 = vrot.lane.b32.xlu0 %v958, 32
  %v961 = vpop.permute.xlu0 %960
  %s963 = scalar_lea.vmem [#allocation3], 24
  %964 = vst.msk [vmem:[%s963] sm:$0xff] %vm352, %v961
  %966 = vset.pattern.permute.xlu0 0
  %967 = vperm.xlu0 %966, %v498
  %v968 = vpop.permute.xlu0 %967
  %v970 = vmul.f32 %v968, %v958
  %v971 = vmul.f32 %v968, %v952
  %s972 = scalar_lea.vmem [#allocation2], 32
  %v973 = vld [vmem:[%s972] sm:$0xff]
  %975 = vrot.lane.b32.xlu0 %v970, 32
  %v976 = vpop.permute.xlu0 %975
  %v977 = vsel %vm352, %v976, 0
  %979 = vmatprep.subr.mxu0 0.0
  %980 = vmatpush1.msra.mxu0 %v490
  %981 = vmatprep.subr.mxu0 0.0
  %982 = vmatpush1.msra.mxu0 %v491
  %983 = vmatprep.subr.mxu0 0.0
  %984 = vmatpush1.msra.mxu0 %v492
  %985 = vmatprep.subr.mxu0 0.0
  %986 = vmatpush1.msra.mxu0 %v493
  %987 = vmatprep.subr.mxu0 0.0
  %988 = vmatpush1.msra.mxu0 0.0
  %989 = vmatprep.subr.mxu0 0.0
  %990 = vmatpush1.msra.mxu0 0.0
  %991 = vmatprep.subr.mxu0 0.0
  %992 = vmatpush1.msra.mxu0 0.0
  %993 = vmatprep.subr.mxu0 0.0
  %994 = vmatpush1.msra.mxu0 0.0
  %995 = vmatprep.subr.mxu0 0.0
  %996 = vmatpush1.msra.mxu0 0.0
  %997 = vmatprep.subr.mxu0 0.0
  %998 = vmatpush1.msra.mxu0 0.0
  %999 = vmatprep.subr.mxu0 0.0
  %1000 = vmatpush1.msra.mxu0 0.0
  %1001 = vmatprep.subr.mxu0 0.0
  %1002 = vmatpush1.msra.mxu0 0.0
  %1003 = vmatprep.subr.mxu0 0.0
  %1004 = vmatpush1.msra.mxu0 0.0
  %1005 = vmatprep.subr.mxu0 0.0
  %1006 = vmatpush1.msra.mxu0 0.0
  %1007 = vmatprep.subr.mxu0 0.0
  %1008 = vmatpush1.msra.mxu0 0.0
  %1009 = vmatprep.subr.mxu0 0.0
  %1010 = vmatpush1.msra.mxu0 0.0
  %1011 = vmatprep.subr.mxu0 0.0
  %1012 = vmatpush1.msra.mxu0 0.0
  %1013 = vmatprep.subr.mxu0 0.0
  %1014 = vmatpush1.msra.mxu0 0.0
  %1015 = vmatprep.subr.mxu0 0.0
  %1016 = vmatpush1.msra.mxu0 0.0
  %1017 = vmatprep.subr.mxu0 0.0
  %1018 = vmatpush1.msra.mxu0 0.0
  %1019 = vmatprep.subr.mxu0 0.0
  %1020 = vmatpush1.msra.mxu0 0.0
  %1021 = vmatprep.subr.mxu0 0.0
  %1022 = vmatpush1.msra.mxu0 0.0
  %1023 = vmatprep.subr.mxu0 0.0
  %1024 = vmatpush1.msra.mxu0 0.0
  %1025 = vmatprep.subr.mxu0 0.0
  %1026 = vmatpush1.msra.mxu0 0.0
  %1027 = vmatprep.subr.mxu0 0.0
  %1028 = vmatpush1.msra.mxu0 0.0
  %1029 = vmatprep.subr.mxu0 0.0
  %1030 = vmatpush1.msra.mxu0 0.0
  %1031 = vmatprep.subr.mxu0 0.0
  %1032 = vmatpush1.msra.mxu0 0.0
  %1033 = vmatprep.subr.mxu0 0.0
  %1034 = vmatpush1.msra.mxu0 0.0
  %1035 = vmatprep.subr.mxu0 0.0
  %1036 = vmatpush1.msra.mxu0 0.0
  %1037 = vmatprep.subr.mxu0 0.0
  %1038 = vmatpush1.msra.mxu0 0.0
  %1039 = vmatprep.subr.mxu0 0.0
  %1040 = vmatpush1.msra.mxu0 0.0
  %1041 = vmatprep.subr.mxu0 0.0
  %1042 = vmatpush1.msra.mxu0 0.0
  %1043 = vmatprep.mubr.f32.mxu0 0.0
  %1044 = vmatmul.mubr.f32.gmra.mrb[0].mxu0 %v977
  %v1045 = vpop.f32.mrb[0].mxu0
  %v1046 = vadd.f32 0.0, %v1045
  %v1047 = vpop.f32.mrb[0].mxu0
  %1048 = vdwg.mxu0
  %v1049 = vadd.f32 %v973, %v1046
  %v1050 = vmul.f32 %v1049, 0.5
  %v1051 = vsel %vm506, %v1049, %v1050
  %v1052 = vtanh.pop %v1051
  %v1053 = vmul.f32 %v1052, 0.5
  %v1054 = vadd.f32 %v1053, 0.5
  %v1055 = vsel %vm506, %v1052, %v1054
  %v1056 = vmul.f32 %v1055, %v971
  %1058 = vrot.lane.b32.xlu0 %v1055, 64
  %v1059 = vpop.permute.xlu0 %1058
  %v1061 = vmul.f32 %v1055, %v1059
  %1063 = vrot.lane.b32.xlu0 %v1061, 32
  %v1064 = vpop.permute.xlu0 %1063
  %v1066 = vadd.f32 %v1056, %v1064
  %v1067 = vtanh.pop %v1066
  %1069 = vrot.lane.b32.xlu0 %v1067, 64
  %v1070 = vpop.permute.xlu0 %1069
  %v1072 = vmul.f32 %v1055, %v1070
  %1074 = vrot.lane.b32.xlu0 %v1072, 32
  %v1075 = vpop.permute.xlu0 %1074
  %s1077 = scalar_lea.vmem [#allocation3], 32
  %1078 = vst.msk [vmem:[%s1077] sm:$0xff] %vm352, %v1075
  %1080 = vset.pattern.permute.xlu0 0
  %1081 = vperm.xlu0 %1080, %v499
  %v1082 = vpop.permute.xlu0 %1081
  %v1084 = vmul.f32 %v1082, %v1072
  %v1085 = vmul.f32 %v1082, %v1066
  %s1086 = scalar_lea.vmem [#allocation2], 40
  %v1087 = vld [vmem:[%s1086] sm:$0xff]
  %1089 = vrot.lane.b32.xlu0 %v1084, 32
  %v1090 = vpop.permute.xlu0 %1089
  %v1091 = vsel %vm352, %v1090, 0
  %1093 = vmatprep.subr.mxu0 0.0
  %1094 = vmatpush1.msra.mxu0 %v490
  %1095 = vmatprep.subr.mxu0 0.0
  %1096 = vmatpush1.msra.mxu0 %v491
  %1097 = vmatprep.subr.mxu0 0.0
  %1098 = vmatpush1.msra.mxu0 %v492
  %1099 = vmatprep.subr.mxu0 0.0
  %1100 = vmatpush1.msra.mxu0 %v493
  %1101 = vmatprep.subr.mxu0 0.0
  %1102 = vmatpush1.msra.mxu0 0.0
  %1103 = vmatprep.subr.mxu0 0.0
  %1104 = vmatpush1.msra.mxu0 0.0
  %1105 = vmatprep.subr.mxu0 0.0
  %1106 = vmatpush1.msra.mxu0 0.0
  %1107 = vmatprep.subr.mxu0 0.0
  %1108 = vmatpush1.msra.mxu0 0.0
  %1109 = vmatprep.subr.mxu0 0.0
  %1110 = vmatpush1.msra.mxu0 0.0
  %1111 = vmatprep.subr.mxu0 0.0
  %1112 = vmatpush1.msra.mxu0 0.0
  %1113 = vmatprep.subr.mxu0 0.0
  %1114 = vmatpush1.msra.mxu0 0.0
  %1115 = vmatprep.subr.mxu0 0.0
  %1116 = vmatpush1.msra.mxu0 0.0
  %1117 = vmatprep.subr.mxu0 0.0
  %1118 = vmatpush1.msra.mxu0 0.0
  %1119 = vmatprep.subr.mxu0 0.0
  %1120 = vmatpush1.msra.mxu0 0.0
  %1121 = vmatprep.subr.mxu0 0.0
  %1122 = vmatpush1.msra.mxu0 0.0
  %1123 = vmatprep.subr.mxu0 0.0
  %1124 = vmatpush1.msra.mxu0 0.0
  %1125 = vmatprep.subr.mxu0 0.0
  %1126 = vmatpush1.msra.mxu0 0.0
  %1127 = vmatprep.subr.mxu0 0.0
  %1128 = vmatpush1.msra.mxu0 0.0
  %1129 = vmatprep.subr.mxu0 0.0
  %1130 = vmatpush1.msra.mxu0 0.0
  %1131 = vmatprep.subr.mxu0 0.0
  %1132 = vmatpush1.msra.mxu0 0.0
  %1133 = vmatprep.subr.mxu0 0.0
  %1134 = vmatpush1.msra.mxu0 0.0
  %1135 = vmatprep.subr.mxu0 0.0
  %1136 = vmatpush1.msra.mxu0 0.0
  %1137 = vmatprep.subr.mxu0 0.0
  %1138 = vmatpush1.msra.mxu0 0.0
  %1139 = vmatprep.subr.mxu0 0.0
  %1140 = vmatpush1.msra.mxu0 0.0
  %1141 = vmatprep.subr.mxu0 0.0
  %1142 = vmatpush1.msra.mxu0 0.0
  %1143 = vmatprep.subr.mxu0 0.0
  %1144 = vmatpush1.msra.mxu0 0.0
  %1145 = vmatprep.subr.mxu0 0.0
  %1146 = vmatpush1.msra.mxu0 0.0
  %1147 = vmatprep.subr.mxu0 0.0
  %1148 = vmatpush1.msra.mxu0 0.0
  %1149 = vmatprep.subr.mxu0 0.0
  %1150 = vmatpush1.msra.mxu0 0.0
  %1151 = vmatprep.subr.mxu0 0.0
  %1152 = vmatpush1.msra.mxu0 0.0
  %1153 = vmatprep.subr.mxu0 0.0
  %1154 = vmatpush1.msra.mxu0 0.0
  %1155 = vmatprep.subr.mxu0 0.0
  %1156 = vmatpush1.msra.mxu0 0.0
  %1157 = vmatprep.mubr.f32.mxu0 0.0
  %1158 = vmatmul.mubr.f32.gmra.mrb[0].mxu0 %v1091
  %v1159 = vpop.f32.mrb[0].mxu0
  %v1160 = vadd.f32 0.0, %v1159
  %v1161 = vpop.f32.mrb[0].mxu0
  %1162 = vdwg.mxu0
  %v1163 = vadd.f32 %v1087, %v1160
  %v1164 = vmul.f32 %v1163, 0.5
  %v1165 = vsel %vm506, %v1163, %v1164
  %v1166 = vtanh.pop %v1165
  %v1167 = vmul.f32 %v1166, 0.5
  %v1168 = vadd.f32 %v1167, 0.5
  %v1169 = vsel %vm506, %v1166, %v1168
  %v1170 = vmul.f32 %v1169, %v1085
  %1172 = vrot.lane.b32.xlu0 %v1169, 64
  %v1173 = vpop.permute.xlu0 %1172
  %v1175 = vmul.f32 %v1169, %v1173
  %1177 = vrot.lane.b32.xlu0 %v1175, 32
  %v1178 = vpop.permute.xlu0 %1177
  %v1180 = vadd.f32 %v1170, %v1178
  %v1181 = vtanh.pop %v1180
  %1183 = vrot.lane.b32.xlu0 %v1181, 64
  %v1184 = vpop.permute.xlu0 %1183
  %v1186 = vmul.f32 %v1169, %v1184
  %1188 = vrot.lane.b32.xlu0 %v1186, 32
  %v1189 = vpop.permute.xlu0 %1188
  %s1191 = scalar_lea.vmem [#allocation3], 40
  %1192 = vst.msk [vmem:[%s1191] sm:$0xff] %vm352, %v1189
  %1194 = vset.pattern.permute.xlu0 0
  %1195 = vperm.xlu0 %1194, %v500
  %v1196 = vpop.permute.xlu0 %1195
  %v1198 = vmul.f32 %v1196, %v1186
  %v1199 = vmul.f32 %v1196, %v1180
  %s1200 = scalar_lea.vmem [#allocation2], 48
  %v1201 = vld [vmem:[%s1200] sm:$0xff]
  %1203 = vrot.lane.b32.xlu0 %v1198, 32
  %v1204 = vpop.permute.xlu0 %1203
  %v1205 = vsel %vm352, %v1204, 0
  %1207 = vmatprep.subr.mxu0 0.0
  %1208 = vmatpush1.msra.mxu0 %v490
  %1209 = vmatprep.subr.mxu0 0.0
  %1210 = vmatpush1.msra.mxu0 %v491
  %1211 = vmatprep.subr.mxu0 0.0
  %1212 = vmatpush1.msra.mxu0 %v492
  %1213 = vmatprep.subr.mxu0 0.0
  %1214 = vmatpush1.msra.mxu0 %v493
  %1215 = vmatprep.subr.mxu0 0.0
  %1216 = vmatpush1.msra.mxu0 0.0
  %1217 = vmatprep.subr.mxu0 0.0
  %1218 = vmatpush1.msra.mxu0 0.0
  %1219 = vmatprep.subr.mxu0 0.0
  %1220 = vmatpush1.msra.mxu0 0.0
  %1221 = vmatprep.subr.mxu0 0.0
  %1222 = vmatpush1.msra.mxu0 0.0
  %1223 = vmatprep.subr.mxu0 0.0
  %1224 = vmatpush1.msra.mxu0 0.0
  %1225 = vmatprep.subr.mxu0 0.0
  %1226 = vmatpush1.msra.mxu0 0.0
  %1227 = vmatprep.subr.mxu0 0.0
  %1228 = vmatpush1.msra.mxu0 0.0
  %1229 = vmatprep.subr.mxu0 0.0
  %1230 = vmatpush1.msra.mxu0 0.0
  %1231 = vmatprep.subr.mxu0 0.0
  %1232 = vmatpush1.msra.mxu0 0.0
  %1233 = vmatprep.subr.mxu0 0.0
  %1234 = vmatpush1.msra.mxu0 0.0
  %1235 = vmatprep.subr.mxu0 0.0
  %1236 = vmatpush1.msra.mxu0 0.0
  %1237 = vmatprep.subr.mxu0 0.0
  %1238 = vmatpush1.msra.mxu0 0.0
  %1239 = vmatprep.subr.mxu0 0.0
  %1240 = vmatpush1.msra.mxu0 0.0
  %1241 = vmatprep.subr.mxu0 0.0
  %1242 = vmatpush1.msra.mxu0 0.0
  %1243 = vmatprep.subr.mxu0 0.0
  %1244 = vmatpush1.msra.mxu0 0.0
  %1245 = vmatprep.subr.mxu0 0.0
  %1246 = vmatpush1.msra.mxu0 0.0
  %1247 = vmatprep.subr.mxu0 0.0
  %1248 = vmatpush1.msra.mxu0 0.0
  %1249 = vmatprep.subr.mxu0 0.0
  %1250 = vmatpush1.msra.mxu0 0.0
  %1251 = vmatprep.subr.mxu0 0.0
  %1252 = vmatpush1.msra.mxu0 0.0
  %1253 = vmatprep.subr.mxu0 0.0
  %1254 = vmatpush1.msra.mxu0 0.0
  %1255 = vmatprep.subr.mxu0 0.0
  %1256 = vmatpush1.msra.mxu0 0.0
  %1257 = vmatprep.subr.mxu0 0.0
  %1258 = vmatpush1.msra.mxu0 0.0
  %1259 = vmatprep.subr.mxu0 0.0
  %1260 = vmatpush1.msra.mxu0 0.0
  %1261 = vmatprep.subr.mxu0 0.0
  %1262 = vmatpush1.msra.mxu0 0.0
  %1263 = vmatprep.subr.mxu0 0.0
  %1264 = vmatpush1.msra.mxu0 0.0
  %1265 = vmatprep.subr.mxu0 0.0
  %1266 = vmatpush1.msra.mxu0 0.0
  %1267 = vmatprep.subr.mxu0 0.0
  %1268 = vmatpush1.msra.mxu0 0.0
  %1269 = vmatprep.subr.mxu0 0.0
  %1270 = vmatpush1.msra.mxu0 0.0
  %1271 = vmatprep.mubr.f32.mxu0 0.0
  %1272 = vmatmul.mubr.f32.gmra.mrb[0].mxu0 %v1205
  %v1273 = vpop.f32.mrb[0].mxu0
  %v1274 = vadd.f32 0.0, %v1273
  %v1275 = vpop.f32.mrb[0].mxu0
  %1276 = vdwg.mxu0
  %v1277 = vadd.f32 %v1201, %v1274
  %v1278 = vmul.f32 %v1277, 0.5
  %v1279 = vsel %vm506, %v1277, %v1278
  %v1280 = vtanh.pop %v1279
  %v1281 = vmul.f32 %v1280, 0.5
  %v1282 = vadd.f32 %v1281, 0.5
  %v1283 = vsel %vm506, %v1280, %v1282
  %v1284 = vmul.f32 %v1283, %v1199
  %1286 = vrot.lane.b32.xlu0 %v1283, 64
  %v1287 = vpop.permute.xlu0 %1286
  %v1289 = vmul.f32 %v1283, %v1287
  %1291 = vrot.lane.b32.xlu0 %v1289, 32
  %v1292 = vpop.permute.xlu0 %1291
  %v1294 = vadd.f32 %v1284, %v1292
  %v1295 = vtanh.pop %v1294
  %1297 = vrot.lane.b32.xlu0 %v1295, 64
  %v1298 = vpop.permute.xlu0 %1297
  %v1300 = vmul.f32 %v1283, %v1298
  %1302 = vrot.lane.b32.xlu0 %v1300, 32
  %v1303 = vpop.permute.xlu0 %1302
  %s1305 = scalar_lea.vmem [#allocation3], 48
  %1306 = vst.msk [vmem:[%s1305] sm:$0xff] %vm352, %v1303
  %1308 = vset.pattern.permute.xlu0 0
  %1309 = vperm.xlu0 %1308, %v501
  %v1310 = vpop.permute.xlu0 %1309
  %v1312 = vmul.f32 %v1310, %v1300
  %v1313 = vmul.f32 %v1310, %v1294
  %s1314 = scalar_lea.vmem [#allocation2], 56
  %v1315 = vld [vmem:[%s1314] sm:$0xff]
  %1317 = vrot.lane.b32.xlu0 %v1312, 32
  %v1318 = vpop.permute.xlu0 %1317
  %v1319 = vsel %vm352, %v1318, 0
  %1321 = vmatprep.subr.mxu0 0.0
  %1322 = vmatpush1.msra.mxu0 %v490
  %1323 = vmatprep.subr.mxu0 0.0
  %1324 = vmatpush1.msra.mxu0 %v491
  %1325 = vmatprep.subr.mxu0 0.0
  %1326 = vmatpush1.msra.mxu0 %v492
  %1327 = vmatprep.subr.mxu0 0.0
  %1328 = vmatpush1.msra.mxu0 %v493
  %1329 = vmatprep.subr.mxu0 0.0
  %1330 = vmatpush1.msra.mxu0 0.0
  %1331 = vmatprep.subr.mxu0 0.0
  %1332 = vmatpush1.msra.mxu0 0.0
  %1333 = vmatprep.subr.mxu0 0.0
  %1334 = vmatpush1.msra.mxu0 0.0
  %1335 = vmatprep.subr.mxu0 0.0
  %1336 = vmatpush1.msra.mxu0 0.0
  %1337 = vmatprep.subr.mxu0 0.0
  %1338 = vmatpush1.msra.mxu0 0.0
  %1339 = vmatprep.subr.mxu0 0.0
  %1340 = vmatpush1.msra.mxu0 0.0
  %1341 = vmatprep.subr.mxu0 0.0
  %1342 = vmatpush1.msra.mxu0 0.0
  %1343 = vmatprep.subr.mxu0 0.0
  %1344 = vmatpush1.msra.mxu0 0.0
  %1345 = vmatprep.subr.mxu0 0.0
  %1346 = vmatpush1.msra.mxu0 0.0
  %1347 = vmatprep.subr.mxu0 0.0
  %1348 = vmatpush1.msra.mxu0 0.0
  %1349 = vmatprep.subr.mxu0 0.0
  %1350 = vmatpush1.msra.mxu0 0.0
  %1351 = vmatprep.subr.mxu0 0.0
  %1352 = vmatpush1.msra.mxu0 0.0
  %1353 = vmatprep.subr.mxu0 0.0
  %1354 = vmatpush1.msra.mxu0 0.0
  %1355 = vmatprep.subr.mxu0 0.0
  %1356 = vmatpush1.msra.mxu0 0.0
  %1357 = vmatprep.subr.mxu0 0.0
  %1358 = vmatpush1.msra.mxu0 0.0
  %1359 = vmatprep.subr.mxu0 0.0
  %1360 = vmatpush1.msra.mxu0 0.0
  %1361 = vmatprep.subr.mxu0 0.0
  %1362 = vmatpush1.msra.mxu0 0.0
  %1363 = vmatprep.subr.mxu0 0.0
  %1364 = vmatpush1.msra.mxu0 0.0
  %1365 = vmatprep.subr.mxu0 0.0
  %1366 = vmatpush1.msra.mxu0 0.0
  %1367 = vmatprep.subr.mxu0 0.0
  %1368 = vmatpush1.msra.mxu0 0.0
  %1369 = vmatprep.subr.mxu0 0.0
  %1370 = vmatpush1.msra.mxu0 0.0
  %1371 = vmatprep.subr.mxu0 0.0
  %1372 = vmatpush1.msra.mxu0 0.0
  %1373 = vmatprep.subr.mxu0 0.0
  %1374 = vmatpush1.msra.mxu0 0.0
  %1375 = vmatprep.subr.mxu0 0.0
  %1376 = vmatpush1.msra.mxu0 0.0
  %1377 = vmatprep.subr.mxu0 0.0
  %1378 = vmatpush1.msra.mxu0 0.0
  %1379 = vmatprep.subr.mxu0 0.0
  %1380 = vmatpush1.msra.mxu0 0.0
  %1381 = vmatprep.subr.mxu0 0.0
  %1382 = vmatpush1.msra.mxu0 0.0
  %1383 = vmatprep.subr.mxu0 0.0
  %1384 = vmatpush1.msra.mxu0 0.0
  %1385 = vmatprep.mubr.f32.mxu0 0.0
  %1386 = vmatmul.mubr.f32.gmra.mrb[0].mxu0 %v1319
  %v1387 = vpop.f32.mrb[0].mxu0
  %v1388 = vadd.f32 0.0, %v1387
  %v1389 = vpop.f32.mrb[0].mxu0
  %1390 = vdwg.mxu0
  %v1391 = vadd.f32 %v1315, %v1388
  %v1392 = vmul.f32 %v1391, 0.5
  %v1393 = vsel %vm506, %v1391, %v1392
  %v1394 = vtanh.pop %v1393
  %v1395 = vmul.f32 %v1394, 0.5
  %v1396 = vadd.f32 %v1395, 0.5
  %v1397 = vsel %vm506, %v1394, %v1396
  %v1398 = vmul.f32 %v1397, %v1313
  %1400 = vrot.lane.b32.xlu0 %v1397, 64
  %v1401 = vpop.permute.xlu0 %1400
  %v1403 = vmul.f32 %v1397, %v1401
  %1405 = vrot.lane.b32.xlu0 %v1403, 32
  %v1406 = vpop.permute.xlu0 %1405
  %v1408 = vadd.f32 %v1398, %v1406
  %v1409 = vtanh.pop %v1408
  %1411 = vrot.lane.b32.xlu0 %v1409, 64
  %v1412 = vpop.permute.xlu0 %1411
  %v1414 = vmul.f32 %v1397, %v1412
  %1416 = vrot.lane.b32.xlu0 %v1414, 32
  %v1417 = vpop.permute.xlu0 %1416
  %s1419 = scalar_lea.vmem [#allocation3], 56
  %1420 = vst.msk [vmem:[%s1419] sm:$0xff] %vm352, %v1417
  %1421 = vst.msk [vmem:[%s14] sm:$0xff] %vm352, %v1417
  %1423 = vrot.lane.b32.xlu0 %v1408, 96
  %v1424 = vpop.permute.xlu0 %1423
  %1426 = vst.msk [vmem:[%s15] sm:$0xff] %vm352, %v1424
  %v1427 = vld [vmem:[#allocation3] sm:$0xff]
  %v1428 = vld [vmem:[#allocation3 + $0x8] sm:$0xff]
  %v1429 = vld [vmem:[#allocation3 + $0x10] sm:$0xff]
  %v1430 = vld [vmem:[#allocation3 + $0x18] sm:$0xff]
  %v1431 = vld [vmem:[#allocation3 + $0x20] sm:$0xff]
  %v1432 = vld [vmem:[#allocation3 + $0x28] sm:$0xff]
  %v1433 = vld [vmem:[#allocation3 + $0x30] sm:$0xff]
  %v1434 = vld [vmem:[#allocation3 + $0x38] sm:$0xff]
  %v1435 = vld [vmem:[%s11] sm:$0xff]
  %v1436 = vld [vmem:[%s11 + $0x8] sm:$0xff]
  %v1437 = vld [vmem:[%s11 + $0x10] sm:$0xff]
  %v1438 = vld [vmem:[%s11 + $0x18] sm:$0xff]
  %v1439 = vld [vmem:[%s12] sm:$0x1]
  %v1441 = vlaneseq
  %v1442 = vshrl.u32 %v1441, 7
  %v1443 = vsub.s32 0, %v1442
  %v1444 = vrot.slane %v1439, %v1443
  %v1447 = vsel %vm352, %v1427, 0
  %v1450 = vsel %vm352, %v1428, 0
  %v1453 = vsel %vm352, %v1429, 0
  %v1456 = vsel %vm352, %v1430, 0
  %v1459 = vsel %vm352, %v1431, 0
  %v1462 = vsel %vm352, %v1432, 0
  %v1465 = vsel %vm352, %v1433, 0
  %v1468 = vsel %vm352, %v1434, 0
  %1470 = vmatprep.subr.mxu0 0.0
  %1471 = vmatpush1.msra.mxu0 %v1435
  %1472 = vmatprep.subr.mxu0 0.0
  %1473 = vmatpush1.msra.mxu0 %v1436
  %1474 = vmatprep.subr.mxu0 0.0
  %1475 = vmatpush1.msra.mxu0 %v1437
  %1476 = vmatprep.subr.mxu0 0.0
  %1477 = vmatpush1.msra.mxu0 %v1438
  %1478 = vmatprep.subr.mxu0 0.0
  %1479 = vmatpush1.msra.mxu0 0.0
  %1480 = vmatprep.subr.mxu0 0.0
  %1481 = vmatpush1.msra.mxu0 0.0
  %1482 = vmatprep.subr.mxu0 0.0
  %1483 = vmatpush1.msra.mxu0 0.0
  %1484 = vmatprep.subr.mxu0 0.0
  %1485 = vmatpush1.msra.mxu0 0.0
  %1486 = vmatprep.subr.mxu0 0.0
  %1487 = vmatpush1.msra.mxu0 0.0
  %1488 = vmatprep.subr.mxu0 0.0
  %1489 = vmatpush1.msra.mxu0 0.0
  %1490 = vmatprep.subr.mxu0 0.0
  %1491 = vmatpush1.msra.mxu0 0.0
  %1492 = vmatprep.subr.mxu0 0.0
  %1493 = vmatpush1.msra.mxu0 0.0
  %1494 = vmatprep.subr.mxu0 0.0
  %1495 = vmatpush1.msra.mxu0 0.0
  %1496 = vmatprep.subr.mxu0 0.0
  %1497 = vmatpush1.msra.mxu0 0.0
  %1498 = vmatprep.subr.mxu0 0.0
  %1499 = vmatpush1.msra.mxu0 0.0
  %1500 = vmatprep.subr.mxu0 0.0
  %1501 = vmatpush1.msra.mxu0 0.0
  %1502 = vmatprep.subr.mxu0 0.0
  %1503 = vmatpush1.msra.mxu0 0.0
  %1504 = vmatprep.subr.mxu0 0.0
  %1505 = vmatpush1.msra.mxu0 0.0
  %1506 = vmatprep.subr.mxu0 0.0
  %1507 = vmatpush1.msra.mxu0 0.0
  %1508 = vmatprep.subr.mxu0 0.0
  %1509 = vmatpush1.msra.mxu0 0.0
  %1510 = vmatprep.subr.mxu0 0.0
  %1511 = vmatpush1.msra.mxu0 0.0
  %1512 = vmatprep.subr.mxu0 0.0
  %1513 = vmatpush1.msra.mxu0 0.0
  %1514 = vmatprep.subr.mxu0 0.0
  %1515 = vmatpush1.msra.mxu0 0.0
  %1516 = vmatprep.subr.mxu0 0.0
  %1517 = vmatpush1.msra.mxu0 0.0
  %1518 = vmatprep.subr.mxu0 0.0
  %1519 = vmatpush1.msra.mxu0 0.0
  %1520 = vmatprep.subr.mxu0 0.0
  %1521 = vmatpush1.msra.mxu0 0.0
  %1522 = vmatprep.subr.mxu0 0.0
  %1523 = vmatpush1.msra.mxu0 0.0
  %1524 = vmatprep.subr.mxu0 0.0
  %1525 = vmatpush1.msra.mxu0 0.0
  %1526 = vmatprep.subr.mxu0 0.0
  %1527 = vmatpush1.msra.mxu0 0.0
  %1528 = vmatprep.subr.mxu0 0.0
  %1529 = vmatpush1.msra.mxu0 0.0
  %1530 = vmatprep.subr.mxu0 0.0
  %1531 = vmatpush1.msra.mxu0 0.0
  %1532 = vmatprep.subr.mxu0 0.0
  %1533 = vmatpush1.msra.mxu0 0.0
  %1534 = vmatprep.mubr.f32.mxu0 0.0
  %1535 = vmatmul.mubr.f32.gmra.mrb[0].mxu0 %v1447
  %v1536 = vpop.f32.mrb[0].mxu0
  %v1537 = vadd.f32 %v1444, %v1536
  %v1538 = vpop.f32.mrb[0].mxu0
  %1539 = vmatprep.mubr.f32.mxu0 0.0
  %1540 = vmatmul.mubr.f32.gmra.mrb[0].mxu0 %v1450
  %v1541 = vpop.f32.mrb[0].mxu0
  %v1542 = vadd.f32 %v1444, %v1541
  %v1543 = vpop.f32.mrb[0].mxu0
  %1544 = vmatprep.mubr.f32.mxu0 0.0
  %1545 = vmatmul.mubr.f32.gmra.mrb[0].mxu0 %v1453
  %v1546 = vpop.f32.mrb[0].mxu0
  %v1547 = vadd.f32 %v1444, %v1546
  %v1548 = vpop.f32.mrb[0].mxu0
  %1549 = vmatprep.mubr.f32.mxu0 0.0
  %1550 = vmatmul.mubr.f32.gmra.mrb[0].mxu0 %v1456
  %v1551 = vpop.f32.mrb[0].mxu0
  %v1552 = vadd.f32 %v1444, %v1551
  %v1553 = vpop.f32.mrb[0].mxu0
  %1554 = vmatprep.mubr.f32.mxu0 0.0
  %1555 = vmatmul.mubr.f32.gmra.mrb[0].mxu0 %v1459
  %v1556 = vpop.f32.mrb[0].mxu0
  %v1557 = vadd.f32 %v1444, %v1556
  %v1558 = vpop.f32.mrb[0].mxu0
  %1559 = vmatprep.mubr.f32.mxu0 0.0
  %1560 = vmatmul.mubr.f32.gmra.mrb[0].mxu0 %v1462
  %v1561 = vpop.f32.mrb[0].mxu0
  %v1562 = vadd.f32 %v1444, %v1561
  %v1563 = vpop.f32.mrb[0].mxu0
  %1564 = vmatprep.mubr.f32.mxu0 0.0
  %1565 = vmatmul.mubr.f32.gmra.mrb[0].mxu0 %v1465
  %v1566 = vpop.f32.mrb[0].mxu0
  %v1567 = vadd.f32 %v1444, %v1566
  %v1568 = vpop.f32.mrb[0].mxu0
  %1569 = vmatprep.mubr.f32.mxu0 0.0
  %1570 = vmatmul.mubr.f32.gmra.mrb[0].mxu0 %v1468
  %v1571 = vpop.f32.mrb[0].mxu0
  %v1572 = vadd.f32 %v1444, %v1571
  %v1573 = vpop.f32.mrb[0].mxu0
  %1574 = vdwg.mxu0
  %vm1575 = vcmask 23552
  %1576 = vst.msk [vmem:[%s13] sm:$0xff] %vm1575, %v1537
  %1577 = vst.msk [vmem:[%s13 + $0x8] sm:$0xff] %vm1575, %v1542
  %1578 = vst.msk [vmem:[%s13 + $0x10] sm:$0xff] %vm1575, %v1547
  %1579 = vst.msk [vmem:[%s13 + $0x18] sm:$0xff] %vm1575, %v1552
  %1580 = vst.msk [vmem:[%s13 + $0x20] sm:$0xff] %vm1575, %v1557
  %1581 = vst.msk [vmem:[%s13 + $0x28] sm:$0xff] %vm1575, %v1562
  %1582 = vst.msk [vmem:[%s13 + $0x30] sm:$0xff] %vm1575, %v1567
  %1583 = vst.msk [vmem:[%s13 + $0x38] sm:$0xff] %vm1575, %v1572
  // Predicated region
  $region54: #{a2c_forward.1} parent=0 // pred_check
    _
  $region55: #{a2c_forward.1} parent=0 // pred_check_branch
    %1585 = sbr.rel (0) target = $region57
  $region56: #{a2c_forward.1} parent=0 // pred_region
    _
  $region57: #{a2c_forward.1} parent=0 // pred_fallthru
    _
  // Predicated region
  $region58: #{a2c_forward.1} parent=0 // pred_check
    _
  $region59: #{a2c_forward.1} parent=0 // pred_check_branch
    %1587 = sbr.rel (0) target = $region61
  $region60: #{a2c_forward.1} parent=0 // pred_region
    _
  $region61: #{a2c_forward.1} parent=0 // pred_fallthru
    _
  // Predicated region
  $region62: #{a2c_forward.1} parent=0 // pred_check
    _
  $region63: #{a2c_forward.1} parent=0 // pred_check_branch
    %1589 = sbr.rel (0) target = $region65
  $region64: #{a2c_forward.1} parent=0 // pred_region
    _
  $region65: #{a2c_forward.1} parent=0 // pred_fallthru
    _
  // Predicated region
  $region66: #{a2c_forward.1} parent=0 // pred_check
    _
  $region67: #{a2c_forward.1} parent=0 // pred_check_branch
    %1591 = sbr.rel (0) target = $region69
  $region68: #{a2c_forward.1} parent=0 // pred_region
    _
  $region69: #{a2c_forward.1} parent=0 // pred_fallthru
    _
  // Predicated region
  $region70: #{a2c_forward.1} parent=0 // pred_check
    _
  $region71: #{a2c_forward.1} parent=0 // pred_check_branch
    %1593 = sbr.rel (0) target = $region73
  $region72: #{a2c_forward.1} parent=0 // pred_region
    _
  $region73: #{a2c_forward.1} parent=0 // pred_fallthru
    _
  // Predicated region
  $region74: #{a2c_forward.1} parent=0 // pred_check
    _
  $region75: #{a2c_forward.1} parent=0 // pred_check_branch
    %1595 = sbr.rel (0) target = $region77
  $region76: #{a2c_forward.1} parent=0 // pred_region
    _
  $region77: #{a2c_forward.1} parent=0 // pred_fallthru
    _

</llo_original>
